<compile_context>
chip_gen: v5e
topology: v5e:2x2
jax: 0.10.0
libtpu: 0.0.40
codegen_flags: <defaults>
</compile_context>

<pallas_src>
import functools

import jax
import jax.numpy as jnp
from jax.experimental import pallas as pl
from jax.experimental.pallas import tpu as pltpu

# Layer table after fusing fc5_mean|fc5_logvar (same input h4) into one head.
ENC_DIMS = [(300, 200), (200, 100), (100, 80), (80, 40)]   # fc1..fc4
HEAD_DIM = (40, 24)                                        # [fc5_mean | fc5_logvar]
DEC_DIMS = [(12, 40), (40, 80), (80, 100), (100, 200), (200, 300)]  # fc6..fc10
ALL_DIMS = ENC_DIMS + [HEAD_DIM] + DEC_DIMS                # 10 matmuls

LATENT = 12
IN_FEATURES = 300
MAX_TILE_B = 512  # batch tile (>=512 rows hits HBM roofline, fits v7x VMEM)

# Biases packed into one lane-dense (1, BIAS_TOTAL) f32 buffer; each segment
# starts on a 128-lane boundary so in-kernel static slices are lane-aligned.
_BIAS_OFFSETS = []
_off = 0
for (_fin, _fout) in ALL_DIMS:
    _BIAS_OFFSETS.append(_off)
    _off += ((_fout + 127) // 128) * 128
BIAS_TOTAL = _off  # = 1792


def vae1_kernel(x_ref, eps_ref,
                w1, w2, w3, w4, w5, w6, w7, w8, w9, w10,
                b_ref,
                recon_ref, mulogvar_ref):
    ws = (w1, w2, w3, w4, w5, w6, w7, w8, w9, w10)

    def linear(h, layer):
        out = ALL_DIMS[layer][1]
        off = _BIAS_OFFSETS[layer]
        # bf16 operands on the MXU, f32 accumulation; bias add in f32.
        y = jnp.dot(h.astype(jnp.bfloat16), ws[layer][...],
                    preferred_element_type=jnp.float32)
        return y + b_ref[:, off:off + out]

    # ---- encoder ----
    h = x_ref[...]
    h = jnp.maximum(linear(h, 0), 0.0)   # fc1 + relu
    h = jnp.maximum(linear(h, 1), 0.0)   # fc2 + relu
    h = jnp.maximum(linear(h, 2), 0.0)   # fc3 + relu
    h = jnp.maximum(linear(h, 3), 0.0)   # fc4 + relu

    ml = linear(h, 4)                    # fused head: (tile_b, 24) = [mu | logvar]
    mu = ml[:, :LATENT]
    logvar = ml[:, LATENT:]

    # ---- reparametrization (matches torch: std = 0.5 * exp(logvar)) ----
    std = 0.5 * jnp.exp(logvar)
    z = eps_ref[...] * std + mu

    # ---- decoder ----
    h = jnp.maximum(linear(z, 5), 0.0)   # fc6 + relu
    h = jnp.maximum(linear(h, 6), 0.0)   # fc7 + relu
    h = jnp.maximum(linear(h, 7), 0.0)   # fc8 + relu
    h = jnp.maximum(linear(h, 8), 0.0)   # fc9 + relu
    recon = jax.nn.sigmoid(linear(h, 9)) # fc10 + sigmoid

    recon_ref[...] = recon.astype(recon_ref.dtype)
    mulogvar_ref[...] = ml.astype(mulogvar_ref.dtype)


@jax.jit
def vae1_forward(x, eps, weights, bias_packed):
    """weights: tuple of 10 bf16 (in, out) arrays; bias_packed: (1, BIAS_TOTAL) f32."""
    batch = x.shape[0]
    tile_b = min(batch, MAX_TILE_B)
    grid = (pl.cdiv(batch, tile_b),)

    # Activations / outputs are tiled over batch; weights and the packed bias
    # always map to block (0, 0) so they stay VMEM-resident across grid steps.
    x_spec = pl.BlockSpec((tile_b, IN_FEATURES), lambda i: (i, 0))
    eps_spec = pl.BlockSpec((tile_b, LATENT), lambda i: (i, 0))
    w_specs = [pl.BlockSpec((fin, fout), lambda i: (0, 0)) for (fin, fout) in ALL_DIMS]
    b_spec = pl.BlockSpec((1, BIAS_TOTAL), lambda i: (0, 0))

    recon_spec = pl.BlockSpec((tile_b, IN_FEATURES), lambda i: (i, 0))
    mulogvar_spec = pl.BlockSpec((tile_b, 2 * LATENT), lambda i: (i, 0))

    out_shapes = (
        jax.ShapeDtypeStruct((batch, IN_FEATURES), jnp.float32),   # reconstruction
        jax.ShapeDtypeStruct((batch, 2 * LATENT), jnp.float32),    # [mu | logvar]
    )

    recon, mulogvar = pl.pallas_call(
        vae1_kernel,
        grid=grid,
        in_specs=[x_spec, eps_spec] + w_specs + [b_spec],
        out_specs=(recon_spec, mulogvar_spec),
        out_shape=out_shapes,
        compiler_params=pltpu.CompilerParams(
            dimension_semantics=("parallel",),
            vmem_limit_bytes=32 * 1024 * 1024,
        ),
    )(x, eps, *weights, bias_packed)

    mu = mulogvar[:, :LATENT]
    logvar = mulogvar[:, LATENT:]
    return recon, mu, logvar


def init_params(key):
    """PyTorch-style U(-1/sqrt(fan_in), 1/sqrt(fan_in)) init.

    Returns (weights_bf16, bias_packed_f32) with the fc5_mean/fc5_logvar head
    fused into one (40, 24) weight and all biases packed lane-aligned.
    """
    torch_dims = [
        (300, 200), (200, 100), (100, 80), (80, 40),   # fc1..fc4
        (40, 12), (40, 12),                            # fc5_mean, fc5_logvar
        (12, 40), (40, 80), (80, 100), (100, 200), (200, 300),  # fc6..fc10
    ]
    raw_w, raw_b = [], []
    for (fan_in, fan_out) in torch_dims:
        key, kw, kb = jax.random.split(key, 3)
        bound = 1.0 / jnp.sqrt(jnp.float32(fan_in))
        raw_w.append(jax.random.uniform(kw, (fan_in, fan_out), jnp.float32, -bound, bound))
        raw_b.append(jax.random.uniform(kb, (fan_out,), jnp.float32, -bound, bound))

    # Fuse the two 40->12 heads into one 40->24 layer.
    fused_w = raw_w[:4] + [jnp.concatenate([raw_w[4], raw_w[5]], axis=1)] + raw_w[6:]
    fused_b = raw_b[:4] + [jnp.concatenate([raw_b[4], raw_b[5]], axis=0)] + raw_b[6:]

    weights = tuple(w.astype(jnp.bfloat16) for w in fused_w)

    bias_packed = jnp.zeros((1, BIAS_TOTAL), jnp.float32)
    for b, off in zip(fused_b, _BIAS_OFFSETS):
        bias_packed = bias_packed.at[0, off:off + b.shape[0]].set(b)

    return weights, bias_packed


def _reference_forward(x, eps, weights, bias_packed):
    """Pure-JAX reference with identical bf16 matmul casts (for validation)."""
    def lin(h, layer):
        fout = ALL_DIMS[layer][1]
        off = _BIAS_OFFSETS[layer]
        b = bias_packed[0, off:off + fout]
        return jnp.dot(h.astype(jnp.bfloat16), weights[layer],
                       preferred_element_type=jnp.float32) + b

    h = x
    for i in range(4):
        h = jnp.maximum(lin(h, i), 0.0)
    ml = lin(h, 4)
    mu, logvar = ml[:, :LATENT], ml[:, LATENT:]
    z = eps * (0.5 * jnp.exp(logvar)) + mu
    h = z
    for i in range(5, 9):
        h = jnp.maximum(lin(h, i), 0.0)
    recon = jax.nn.sigmoid(lin(h, 9))
    return recon, mu, logvar


if __name__ == "__main__":
    key = jax.random.PRNGKey(0)
    k_x, k_eps, k_p = jax.random.split(key, 3)

    batch = 8
    x = jax.random.normal(k_x, (batch, IN_FEATURES), dtype=jnp.float32)
    eps = jax.random.normal(k_eps, (batch, LATENT), dtype=jnp.float32)  # torch.randn
    weights, bias_packed = init_params(k_p)

    recon, mu, logvar = vae1_forward(x, eps, weights, bias_packed)
    jax.block_until_ready((recon, mu, logvar))

    assert recon.shape == (batch, IN_FEATURES)
    assert mu.shape == (batch, LATENT)
    assert logvar.shape == (batch, LATENT)

    r_recon, r_mu, r_logvar = _reference_forward(x, eps, weights, bias_packed)
    assert jnp.allclose(recon, r_recon, atol=2e-2, rtol=2e-2)
    assert jnp.allclose(mu, r_mu, atol=2e-2, rtol=2e-2)
    assert jnp.allclose(logvar, r_logvar, atol=2e-2, rtol=2e-2)

    print("KERNEL_OK")
</pallas_src>

<mosaic_0001>
module attributes {stable_mosaic.version = 11 : i64} {
  func.func @vae1_kernel(%arg0: i32, %arg1: memref<8x300xf32, #tpu.memory_space<vmem>>, %arg2: memref<8x12xf32, #tpu.memory_space<vmem>>, %arg3: memref<300x200xbf16, #tpu.memory_space<vmem>>, %arg4: memref<200x100xbf16, #tpu.memory_space<vmem>>, %arg5: memref<100x80xbf16, #tpu.memory_space<vmem>>, %arg6: memref<80x40xbf16, #tpu.memory_space<vmem>>, %arg7: memref<40x24xbf16, #tpu.memory_space<vmem>>, %arg8: memref<12x40xbf16, #tpu.memory_space<vmem>>, %arg9: memref<40x80xbf16, #tpu.memory_space<vmem>>, %arg10: memref<80x100xbf16, #tpu.memory_space<vmem>>, %arg11: memref<100x200xbf16, #tpu.memory_space<vmem>>, %arg12: memref<200x300xbf16, #tpu.memory_space<vmem>>, %arg13: memref<1x1792xf32, #tpu.memory_space<vmem>>, %arg14: memref<8x300xf32, #tpu.memory_space<vmem>>, %arg15: memref<8x24xf32, #tpu.memory_space<vmem>>) attributes {dimension_semantics = [#tpu.dimension_semantics<parallel>], iteration_bounds = array<i64: 1>, scalar_prefetch = 0 : i64, scratch_operands = 0 : i64, tpu.core_type = #tpu.core_type<tc>, window_params = [{transform_indices = @transform_0, window_bounds = array<i64: 8, 300>}, {transform_indices = @transform_1, window_bounds = array<i64: 8, 12>}, {pipeline_mode = #tpu.pipeline_mode<synchronous>, transform_indices = @transform_2, window_bounds = array<i64: 300, 200>}, {pipeline_mode = #tpu.pipeline_mode<synchronous>, transform_indices = @transform_3, window_bounds = array<i64: 200, 100>}, {pipeline_mode = #tpu.pipeline_mode<synchronous>, transform_indices = @transform_4, window_bounds = array<i64: 100, 80>}, {pipeline_mode = #tpu.pipeline_mode<synchronous>, transform_indices = @transform_5, window_bounds = array<i64: 80, 40>}, {pipeline_mode = #tpu.pipeline_mode<synchronous>, transform_indices = @transform_6, window_bounds = array<i64: 40, 24>}, {pipeline_mode = #tpu.pipeline_mode<synchronous>, transform_indices = @transform_7, window_bounds = array<i64: 12, 40>}, {pipeline_mode = #tpu.pipeline_mode<synchronous>, transform_indices = @transform_8, window_bounds = array<i64: 40, 80>}, {pipeline_mode = #tpu.pipeline_mode<synchronous>, transform_indices = @transform_9, window_bounds = array<i64: 80, 100>}, {pipeline_mode = #tpu.pipeline_mode<synchronous>, transform_indices = @transform_10, window_bounds = array<i64: 100, 200>}, {pipeline_mode = #tpu.pipeline_mode<synchronous>, transform_indices = @transform_11, window_bounds = array<i64: 200, 300>}, {pipeline_mode = #tpu.pipeline_mode<synchronous>, transform_indices = @transform_12, window_bounds = array<i64: 1, 1792>}, {transform_indices = @transform_13, window_bounds = array<i64: 8, 300>}, {transform_indices = @transform_14, window_bounds = array<i64: 8, 24>}]} {
    %c0 = arith.constant 0 : index
    %c0_0 = arith.constant 0 : index
    %0 = vector.load %arg1[%c0, %c0_0] : memref<8x300xf32, #tpu.memory_space<vmem>>, vector<8x300xf32>
    %1 = arith.truncf %0 : vector<8x300xf32> to vector<8x300xbf16>
    %c0_1 = arith.constant 0 : index
    %c0_2 = arith.constant 0 : index
    %2 = vector.load %arg3[%c0_1, %c0_2] : memref<300x200xbf16, #tpu.memory_space<vmem>>, vector<300x200xbf16>
    %cst = arith.constant dense<0.000000e+00> : vector<8x200xf32>
    %3 = tpu.matmul %1, %2, %cst {dimension_numbers = #tpu.dot_dimension_numbers<[1], [0], [0], [1], [0, 0, 1, 1], [], []>} : vector<8x300xbf16>, vector<300x200xbf16>, vector<8x200xf32> -> vector<8x200xf32>
    %c0_3 = arith.constant 0 : index
    %c0_4 = arith.constant 0 : index
    %4 = vector.load %arg13[%c0_3, %c0_4] : memref<1x1792xf32, #tpu.memory_space<vmem>>, vector<1x200xf32>
    %5 = vector.broadcast %4 : vector<1x200xf32> to vector<8x200xf32>
    %6 = arith.addf %3, %5 : vector<8x200xf32>
    %cst_5 = arith.constant 0.000000e+00 : f32
    %7 = vector.broadcast %cst_5 : f32 to vector<8x200xf32>
    %8 = arith.maximumf %6, %7 : vector<8x200xf32>
    %9 = arith.truncf %8 : vector<8x200xf32> to vector<8x200xbf16>
    %c0_6 = arith.constant 0 : index
    %c0_7 = arith.constant 0 : index
    %10 = vector.load %arg4[%c0_6, %c0_7] : memref<200x100xbf16, #tpu.memory_space<vmem>>, vector<200x100xbf16>
    %cst_8 = arith.constant dense<0.000000e+00> : vector<8x100xf32>
    %11 = tpu.matmul %9, %10, %cst_8 {dimension_numbers = #tpu.dot_dimension_numbers<[1], [0], [0], [1], [0, 0, 1, 1], [], []>} : vector<8x200xbf16>, vector<200x100xbf16>, vector<8x100xf32> -> vector<8x100xf32>
    %c0_9 = arith.constant 0 : index
    %c256 = arith.constant 256 : index
    %12 = vector.load %arg13[%c0_9, %c256] : memref<1x1792xf32, #tpu.memory_space<vmem>>, vector<1x100xf32>
    %13 = vector.broadcast %12 : vector<1x100xf32> to vector<8x100xf32>
    %14 = arith.addf %11, %13 : vector<8x100xf32>
    %cst_10 = arith.constant 0.000000e+00 : f32
    %15 = vector.broadcast %cst_10 : f32 to vector<8x100xf32>
    %16 = arith.maximumf %14, %15 : vector<8x100xf32>
    %17 = arith.truncf %16 : vector<8x100xf32> to vector<8x100xbf16>
    %c0_11 = arith.constant 0 : index
    %c0_12 = arith.constant 0 : index
    %18 = vector.load %arg5[%c0_11, %c0_12] : memref<100x80xbf16, #tpu.memory_space<vmem>>, vector<100x80xbf16>
    %cst_13 = arith.constant dense<0.000000e+00> : vector<8x80xf32>
    %19 = tpu.matmul %17, %18, %cst_13 {dimension_numbers = #tpu.dot_dimension_numbers<[1], [0], [0], [1], [0, 0, 1, 1], [], []>} : vector<8x100xbf16>, vector<100x80xbf16>, vector<8x80xf32> -> vector<8x80xf32>
    %c0_14 = arith.constant 0 : index
    %c384 = arith.constant 384 : index
    %20 = vector.load %arg13[%c0_14, %c384] : memref<1x1792xf32, #tpu.memory_space<vmem>>, vector<1x80xf32>
    %21 = vector.broadcast %20 : vector<1x80xf32> to vector<8x80xf32>
    %22 = arith.addf %19, %21 : vector<8x80xf32>
    %cst_15 = arith.constant 0.000000e+00 : f32
    %23 = vector.broadcast %cst_15 : f32 to vector<8x80xf32>
    %24 = arith.maximumf %22, %23 : vector<8x80xf32>
    %25 = arith.truncf %24 : vector<8x80xf32> to vector<8x80xbf16>
    %c0_16 = arith.constant 0 : index
    %c0_17 = arith.constant 0 : index
    %26 = vector.load %arg6[%c0_16, %c0_17] : memref<80x40xbf16, #tpu.memory_space<vmem>>, vector<80x40xbf16>
    %cst_18 = arith.constant dense<0.000000e+00> : vector<8x40xf32>
    %27 = tpu.matmul %25, %26, %cst_18 {dimension_numbers = #tpu.dot_dimension_numbers<[1], [0], [0], [1], [0, 0, 1, 1], [], []>} : vector<8x80xbf16>, vector<80x40xbf16>, vector<8x40xf32> -> vector<8x40xf32>
    %c0_19 = arith.constant 0 : index
    %c512 = arith.constant 512 : index
    %28 = vector.load %arg13[%c0_19, %c512] : memref<1x1792xf32, #tpu.memory_space<vmem>>, vector<1x40xf32>
    %29 = vector.broadcast %28 : vector<1x40xf32> to vector<8x40xf32>
    %30 = arith.addf %27, %29 : vector<8x40xf32>
    %cst_20 = arith.constant 0.000000e+00 : f32
    %31 = vector.broadcast %cst_20 : f32 to vector<8x40xf32>
    %32 = arith.maximumf %30, %31 : vector<8x40xf32>
    %33 = arith.truncf %32 : vector<8x40xf32> to vector<8x40xbf16>
    %c0_21 = arith.constant 0 : index
    %c0_22 = arith.constant 0 : index
    %34 = vector.load %arg7[%c0_21, %c0_22] : memref<40x24xbf16, #tpu.memory_space<vmem>>, vector<40x24xbf16>
    %cst_23 = arith.constant dense<0.000000e+00> : vector<8x24xf32>
    %35 = tpu.matmul %33, %34, %cst_23 {dimension_numbers = #tpu.dot_dimension_numbers<[1], [0], [0], [1], [0, 0, 1, 1], [], []>} : vector<8x40xbf16>, vector<40x24xbf16>, vector<8x24xf32> -> vector<8x24xf32>
    %c0_24 = arith.constant 0 : index
    %c640 = arith.constant 640 : index
    %36 = vector.load %arg13[%c0_24, %c640] : memref<1x1792xf32, #tpu.memory_space<vmem>>, vector<1x24xf32>
    %37 = vector.broadcast %36 : vector<1x24xf32> to vector<8x24xf32>
    %38 = arith.addf %35, %37 : vector<8x24xf32>
    %39 = vector.extract_strided_slice %38 {offsets = [0, 0], sizes = [8, 12], strides = [1, 1]} : vector<8x24xf32> to vector<8x12xf32>
    %40 = vector.extract_strided_slice %38 {offsets = [0, 12], sizes = [8, 12], strides = [1, 1]} : vector<8x24xf32> to vector<8x12xf32>
    %41 = math.exp %40 : vector<8x12xf32>
    %cst_25 = arith.constant 5.000000e-01 : f32
    %42 = vector.broadcast %cst_25 : f32 to vector<8x12xf32>
    %43 = arith.mulf %42, %41 : vector<8x12xf32>
    %c0_26 = arith.constant 0 : index
    %c0_27 = arith.constant 0 : index
    %44 = vector.load %arg2[%c0_26, %c0_27] : memref<8x12xf32, #tpu.memory_space<vmem>>, vector<8x12xf32>
    %45 = arith.mulf %44, %43 : vector<8x12xf32>
    %46 = arith.addf %45, %39 : vector<8x12xf32>
    %47 = arith.truncf %46 : vector<8x12xf32> to vector<8x12xbf16>
    %c0_28 = arith.constant 0 : index
    %c0_29 = arith.constant 0 : index
    %48 = vector.load %arg8[%c0_28, %c0_29] : memref<12x40xbf16, #tpu.memory_space<vmem>>, vector<12x40xbf16>
    %cst_30 = arith.constant dense<0.000000e+00> : vector<8x40xf32>
    %49 = tpu.matmul %47, %48, %cst_30 {dimension_numbers = #tpu.dot_dimension_numbers<[1], [0], [0], [1], [0, 0, 1, 1], [], []>} : vector<8x12xbf16>, vector<12x40xbf16>, vector<8x40xf32> -> vector<8x40xf32>
    %c0_31 = arith.constant 0 : index
    %c768 = arith.constant 768 : index
    %50 = vector.load %arg13[%c0_31, %c768] : memref<1x1792xf32, #tpu.memory_space<vmem>>, vector<1x40xf32>
    %51 = vector.broadcast %50 : vector<1x40xf32> to vector<8x40xf32>
    %52 = arith.addf %49, %51 : vector<8x40xf32>
    %cst_32 = arith.constant 0.000000e+00 : f32
    %53 = vector.broadcast %cst_32 : f32 to vector<8x40xf32>
    %54 = arith.maximumf %52, %53 : vector<8x40xf32>
    %55 = arith.truncf %54 : vector<8x40xf32> to vector<8x40xbf16>
    %c0_33 = arith.constant 0 : index
    %c0_34 = arith.constant 0 : index
    %56 = vector.load %arg9[%c0_33, %c0_34] : memref<40x80xbf16, #tpu.memory_space<vmem>>, vector<40x80xbf16>
    %cst_35 = arith.constant dense<0.000000e+00> : vector<8x80xf32>
    %57 = tpu.matmul %55, %56, %cst_35 {dimension_numbers = #tpu.dot_dimension_numbers<[1], [0], [0], [1], [0, 0, 1, 1], [], []>} : vector<8x40xbf16>, vector<40x80xbf16>, vector<8x80xf32> -> vector<8x80xf32>
    %c0_36 = arith.constant 0 : index
    %c896 = arith.constant 896 : index
    %58 = vector.load %arg13[%c0_36, %c896] : memref<1x1792xf32, #tpu.memory_space<vmem>>, vector<1x80xf32>
    %59 = vector.broadcast %58 : vector<1x80xf32> to vector<8x80xf32>
    %60 = arith.addf %57, %59 : vector<8x80xf32>
    %cst_37 = arith.constant 0.000000e+00 : f32
    %61 = vector.broadcast %cst_37 : f32 to vector<8x80xf32>
    %62 = arith.maximumf %60, %61 : vector<8x80xf32>
    %63 = arith.truncf %62 : vector<8x80xf32> to vector<8x80xbf16>
    %c0_38 = arith.constant 0 : index
    %c0_39 = arith.constant 0 : index
    %64 = vector.load %arg10[%c0_38, %c0_39] : memref<80x100xbf16, #tpu.memory_space<vmem>>, vector<80x100xbf16>
    %cst_40 = arith.constant dense<0.000000e+00> : vector<8x100xf32>
    %65 = tpu.matmul %63, %64, %cst_40 {dimension_numbers = #tpu.dot_dimension_numbers<[1], [0], [0], [1], [0, 0, 1, 1], [], []>} : vector<8x80xbf16>, vector<80x100xbf16>, vector<8x100xf32> -> vector<8x100xf32>
    %c0_41 = arith.constant 0 : index
    %c1024 = arith.constant 1024 : index
    %66 = vector.load %arg13[%c0_41, %c1024] : memref<1x1792xf32, #tpu.memory_space<vmem>>, vector<1x100xf32>
    %67 = vector.broadcast %66 : vector<1x100xf32> to vector<8x100xf32>
    %68 = arith.addf %65, %67 : vector<8x100xf32>
    %cst_42 = arith.constant 0.000000e+00 : f32
    %69 = vector.broadcast %cst_42 : f32 to vector<8x100xf32>
    %70 = arith.maximumf %68, %69 : vector<8x100xf32>
    %71 = arith.truncf %70 : vector<8x100xf32> to vector<8x100xbf16>
    %c0_43 = arith.constant 0 : index
    %c0_44 = arith.constant 0 : index
    %72 = vector.load %arg11[%c0_43, %c0_44] : memref<100x200xbf16, #tpu.memory_space<vmem>>, vector<100x200xbf16>
    %cst_45 = arith.constant dense<0.000000e+00> : vector<8x200xf32>
    %73 = tpu.matmul %71, %72, %cst_45 {dimension_numbers = #tpu.dot_dimension_numbers<[1], [0], [0], [1], [0, 0, 1, 1], [], []>} : vector<8x100xbf16>, vector<100x200xbf16>, vector<8x200xf32> -> vector<8x200xf32>
    %c0_46 = arith.constant 0 : index
    %c1152 = arith.constant 1152 : index
    %74 = vector.load %arg13[%c0_46, %c1152] : memref<1x1792xf32, #tpu.memory_space<vmem>>, vector<1x200xf32>
    %75 = vector.broadcast %74 : vector<1x200xf32> to vector<8x200xf32>
    %76 = arith.addf %73, %75 : vector<8x200xf32>
    %cst_47 = arith.constant 0.000000e+00 : f32
    %77 = vector.broadcast %cst_47 : f32 to vector<8x200xf32>
    %78 = arith.maximumf %76, %77 : vector<8x200xf32>
    %79 = arith.truncf %78 : vector<8x200xf32> to vector<8x200xbf16>
    %c0_48 = arith.constant 0 : index
    %c0_49 = arith.constant 0 : index
    %80 = vector.load %arg12[%c0_48, %c0_49] : memref<200x300xbf16, #tpu.memory_space<vmem>>, vector<200x300xbf16>
    %cst_50 = arith.constant dense<0.000000e+00> : vector<8x300xf32>
    %81 = tpu.matmul %79, %80, %cst_50 {dimension_numbers = #tpu.dot_dimension_numbers<[1], [0], [0], [1], [0, 0, 1, 1], [], []>} : vector<8x200xbf16>, vector<200x300xbf16>, vector<8x300xf32> -> vector<8x300xf32>
    %c0_51 = arith.constant 0 : index
    %c1408 = arith.constant 1408 : index
    %82 = vector.load %arg13[%c0_51, %c1408] : memref<1x1792xf32, #tpu.memory_space<vmem>>, vector<1x300xf32>
    %83 = vector.broadcast %82 : vector<1x300xf32> to vector<8x300xf32>
    %84 = arith.addf %81, %83 : vector<8x300xf32>
    %85 = arith.negf %84 : vector<8x300xf32>
    %86 = math.exp %85 : vector<8x300xf32>
    %cst_52 = arith.constant 1.000000e+00 : f32
    %87 = vector.broadcast %cst_52 : f32 to vector<8x300xf32>
    %88 = arith.addf %87, %86 : vector<8x300xf32>
    %89 = arith.divf %87, %88 : vector<8x300xf32>
    %c0_53 = arith.constant 0 : index
    %c0_54 = arith.constant 0 : index
    %90 = vector.load %arg14[%c0_53, %c0_54] : memref<8x300xf32, #tpu.memory_space<vmem>>, vector<8x300xf32>
    tpu.vector_store %arg14[%c0_53, %c0_54], %89 {strides = array<i32>} : memref<8x300xf32, #tpu.memory_space<vmem>>, vector<8x300xf32>,
    %c0_55 = arith.constant 0 : index
    %c0_56 = arith.constant 0 : index
    %91 = vector.load %arg15[%c0_55, %c0_56] : memref<8x24xf32, #tpu.memory_space<vmem>>, vector<8x24xf32>
    tpu.vector_store %arg15[%c0_55, %c0_56], %38 {strides = array<i32>} : memref<8x24xf32, #tpu.memory_space<vmem>>, vector<8x24xf32>,
    return
  }
  func.func @transform_0(%arg0: i32) -> (i32, i32) {
    %c0_i32 = arith.constant 0 : i32
    %c0_i32_0 = arith.constant 0 : i32
    return %arg0, %c0_i32 : i32, i32
  }
  func.func @transform_1(%arg0: i32) -> (i32, i32) {
    %c0_i32 = arith.constant 0 : i32
    %c0_i32_0 = arith.constant 0 : i32
    return %arg0, %c0_i32 : i32, i32
  }
  func.func @transform_2(%arg0: i32) -> (i32, i32) {
    %c0_i32 = arith.constant 0 : i32
    %c0_i32_0 = arith.constant 0 : i32
    %c0_i32_1 = arith.constant 0 : i32
    return %c0_i32, %c0_i32_0 : i32, i32
  }
  func.func @transform_3(%arg0: i32) -> (i32, i32) {
    %c0_i32 = arith.constant 0 : i32
    %c0_i32_0 = arith.constant 0 : i32
    %c0_i32_1 = arith.constant 0 : i32
    return %c0_i32, %c0_i32_0 : i32, i32
  }
  func.func @transform_4(%arg0: i32) -> (i32, i32) {
    %c0_i32 = arith.constant 0 : i32
    %c0_i32_0 = arith.constant 0 : i32
    %c0_i32_1 = arith.constant 0 : i32
    return %c0_i32, %c0_i32_0 : i32, i32
  }
  func.func @transform_5(%arg0: i32) -> (i32, i32) {
    %c0_i32 = arith.constant 0 : i32
    %c0_i32_0 = arith.constant 0 : i32
    %c0_i32_1 = arith.constant 0 : i32
    return %c0_i32, %c0_i32_0 : i32, i32
  }
  func.func @transform_6(%arg0: i32) -> (i32, i32) {
    %c0_i32 = arith.constant 0 : i32
    %c0_i32_0 = arith.constant 0 : i32
    %c0_i32_1 = arith.constant 0 : i32
    return %c0_i32, %c0_i32_0 : i32, i32
  }
  func.func @transform_7(%arg0: i32) -> (i32, i32) {
    %c0_i32 = arith.constant 0 : i32
    %c0_i32_0 = arith.constant 0 : i32
    %c0_i32_1 = arith.constant 0 : i32
    return %c0_i32, %c0_i32_0 : i32, i32
  }
  func.func @transform_8(%arg0: i32) -> (i32, i32) {
    %c0_i32 = arith.constant 0 : i32
    %c0_i32_0 = arith.constant 0 : i32
    %c0_i32_1 = arith.constant 0 : i32
    return %c0_i32, %c0_i32_0 : i32, i32
  }
  func.func @transform_9(%arg0: i32) -> (i32, i32) {
    %c0_i32 = arith.constant 0 : i32
    %c0_i32_0 = arith.constant 0 : i32
    %c0_i32_1 = arith.constant 0 : i32
    return %c0_i32, %c0_i32_0 : i32, i32
  }
  func.func @transform_10(%arg0: i32) -> (i32, i32) {
    %c0_i32 = arith.constant 0 : i32
    %c0_i32_0 = arith.constant 0 : i32
    %c0_i32_1 = arith.constant 0 : i32
    return %c0_i32, %c0_i32_0 : i32, i32
  }
  func.func @transform_11(%arg0: i32) -> (i32, i32) {
    %c0_i32 = arith.constant 0 : i32
    %c0_i32_0 = arith.constant 0 : i32
    %c0_i32_1 = arith.constant 0 : i32
    return %c0_i32, %c0_i32_0 : i32, i32
  }
  func.func @transform_12(%arg0: i32) -> (i32, i32) {
    %c0_i32 = arith.constant 0 : i32
    %c0_i32_0 = arith.constant 0 : i32
    %c0_i32_1 = arith.constant 0 : i32
    return %c0_i32, %c0_i32_0 : i32, i32
  }
  func.func @transform_13(%arg0: i32) -> (i32, i32) {
    %c0_i32 = arith.constant 0 : i32
    %c0_i32_0 = arith.constant 0 : i32
    return %arg0, %c0_i32 : i32, i32
  }
  func.func @transform_14(%arg0: i32) -> (i32, i32) {
    %c0_i32 = arith.constant 0 : i32
    %c0_i32_0 = arith.constant 0 : i32
    return %arg0, %c0_i32 : i32, i32
  }
}

</mosaic_0001>

<llo_original>
// kernel: vae1_forward.1
$region0: #{vae1_forward.1}
  #allocation0 [shape = 'u32[]', space=smem, size = 0x4, offset = 0x4, fixed_abs, tag = 'smem constant byte address 0x4 - core index']
  #allocation1 [shape = 'u32[72,128]{1,0:T(1,128)}', space=vmem, size = 0x9000, scoped, tag = 'internal scratch']
  %s0 = inlined_call_operand.vmem [shape: f32[8,300], index: 0, kind: input, shape index: {}]
  %s1 = inlined_call_operand.vmem [shape: f32[8,12], index: 1, kind: input, shape index: {}]
  %s2 = inlined_call_operand.vmem [shape: bf16[300,200], index: 2, kind: input, shape index: {}]
  %s3 = inlined_call_operand.vmem [shape: bf16[200,100], index: 3, kind: input, shape index: {}]
  %s4 = inlined_call_operand.vmem [shape: bf16[100,80], index: 4, kind: input, shape index: {}]
  %s5 = inlined_call_operand.vmem [shape: bf16[80,40], index: 5, kind: input, shape index: {}]
  %s6 = inlined_call_operand.vmem [shape: bf16[40,24], index: 6, kind: input, shape index: {}]
  %s7 = inlined_call_operand.vmem [shape: bf16[12,40], index: 7, kind: input, shape index: {}]
  %s8 = inlined_call_operand.vmem [shape: bf16[40,80], index: 8, kind: input, shape index: {}]
  %s9 = inlined_call_operand.vmem [shape: bf16[80,100], index: 9, kind: input, shape index: {}]
  %s10 = inlined_call_operand.vmem [shape: bf16[100,200], index: 10, kind: input, shape index: {}]
  %s11 = inlined_call_operand.vmem [shape: bf16[200,300], index: 11, kind: input, shape index: {}]
  %s12 = inlined_call_operand.vmem [shape: f32[1,1792], index: 12, kind: input, shape index: {}]
  %s13 = inlined_call_operand.hbm [shape: f32[8,300], index: 13, kind: output, shape index: {0}]
  %s14 = inlined_call_operand.vmem [shape: f32[8,24], index: 14, kind: output, shape index: {1}]
  %15 = xla_tuple %s13, %s14
  %s16 = sld [smem:[#allocation0]]
  $region70: #{vae1_forward.1} parent=0
    _
  %s18 = ssub.s32 1, %s16
  %s19 = scalar_select 0, %s18, %s16
  $region1: #{vae1_forward.1} parent=0
    #allocation2 [shape = 'u8[12288]{0}', space=vmem, size = 0x3000, scoped, tag = 'output window, operand 0, single buffered']
    #allocation3 [shape = 's32[1]{0}', space=sflag, size = 0x4, scoped, tag = 'scoped memory for vae1_forward.1']
    %20 = vsyncpa [#allocation3], 0
    // Predicated region
    $region2: #{vae1_forward.1} parent=1 // pred_check
      _
    $region3: #{vae1_forward.1} parent=1 // pred_check_branch
      %22 = sbr.rel (0) target = $region5
    $region4: #{vae1_forward.1} parent=1 // pred_region
      _
    $region5: #{vae1_forward.1} parent=1 // pred_fallthru
      _
    // Predicated region
    $region6: #{vae1_forward.1} parent=1 // pred_check
      _
    $region7: #{vae1_forward.1} parent=1 // pred_check_branch
      %24 = sbr.rel (0) target = $region9
    $region8: #{vae1_forward.1} parent=1 // pred_region
      _
    $region9: #{vae1_forward.1} parent=1 // pred_fallthru
      _
    // Predicated region
    $region10: #{vae1_forward.1} parent=1 // pred_check
      _
    $region11: #{vae1_forward.1} parent=1 // pred_check_branch
      %26 = sbr.rel (0) target = $region13
    $region12: #{vae1_forward.1} parent=1 // pred_region
      _
    $region13: #{vae1_forward.1} parent=1 // pred_fallthru
      _
    // Predicated region
    $region14: #{vae1_forward.1} parent=1 // pred_check
      _
    $region15: #{vae1_forward.1} parent=1 // pred_check_branch
      %28 = sbr.rel (0) target = $region17
    $region16: #{vae1_forward.1} parent=1 // pred_region
      _
    $region17: #{vae1_forward.1} parent=1 // pred_fallthru
      _
    // Predicated region
    $region18: #{vae1_forward.1} parent=1 // pred_check
      _
    $region19: #{vae1_forward.1} parent=1 // pred_check_branch
      %30 = sbr.rel (0) target = $region21
    $region20: #{vae1_forward.1} parent=1 // pred_region
      _
    $region21: #{vae1_forward.1} parent=1 // pred_fallthru
      _
    // Predicated region
    $region22: #{vae1_forward.1} parent=1 // pred_check
      _
    $region23: #{vae1_forward.1} parent=1 // pred_check_branch
      %32 = sbr.rel (0) target = $region25
    $region24: #{vae1_forward.1} parent=1 // pred_region
      _
    $region25: #{vae1_forward.1} parent=1 // pred_fallthru
      _
    // Predicated region
    $region26: #{vae1_forward.1} parent=1 // pred_check
      _
    $region27: #{vae1_forward.1} parent=1 // pred_check_branch
      %34 = sbr.rel (0) target = $region29
    $region28: #{vae1_forward.1} parent=1 // pred_region
      _
    $region29: #{vae1_forward.1} parent=1 // pred_fallthru
      _
    // Predicated region
    $region30: #{vae1_forward.1} parent=1 // pred_check
      _
    $region31: #{vae1_forward.1} parent=1 // pred_check_branch
      %36 = sbr.rel (0) target = $region33
    $region32: #{vae1_forward.1} parent=1 // pred_region
      _
    $region33: #{vae1_forward.1} parent=1 // pred_fallthru
      _
    // Predicated region
    $region34: #{vae1_forward.1} parent=1 // pred_check
      _
    $region35: #{vae1_forward.1} parent=1 // pred_check_branch
      %38 = sbr.rel (0) target = $region37
    $region36: #{vae1_forward.1} parent=1 // pred_region
      _
    $region37: #{vae1_forward.1} parent=1 // pred_fallthru
      _
    // Predicated region
    $region38: #{vae1_forward.1} parent=1 // pred_check
      _
    $region39: #{vae1_forward.1} parent=1 // pred_check_branch
      %40 = sbr.rel (0) target = $region41
    $region40: #{vae1_forward.1} parent=1 // pred_region
      _
    $region41: #{vae1_forward.1} parent=1 // pred_fallthru
      _
    // Predicated region
    $region42: #{vae1_forward.1} parent=1 // pred_check
      _
    $region43: #{vae1_forward.1} parent=1 // pred_check_branch
      %42 = sbr.rel (0) target = $region45
    $region44: #{vae1_forward.1} parent=1 // pred_region
      _
    $region45: #{vae1_forward.1} parent=1 // pred_fallthru
      _
    // Predicated region
    $region46: #{vae1_forward.1} parent=1 // pred_check
      _
    $region47: #{vae1_forward.1} parent=1 // pred_check_branch
      %44 = sbr.rel (0) target = $region49
    $region48: #{vae1_forward.1} parent=1 // pred_region
      _
    $region49: #{vae1_forward.1} parent=1 // pred_fallthru
      _
    // Predicated region
    $region50: #{vae1_forward.1} parent=1 // pred_check
      _
    $region51: #{vae1_forward.1} parent=1 // pred_check_branch
      %46 = sbr.rel (0) target = $region53
    $region52: #{vae1_forward.1} parent=1 // pred_region
      _
    $region53: #{vae1_forward.1} parent=1 // pred_fallthru
      _
    %v48 = vld [vmem:[%s0] sm:$0xff]
    %v49 = vld [vmem:[%s0 + $0x8] sm:$0xff]
    %v50 = vld [vmem:[%s0 + $0x10] sm:$0xff]
    %v51 = vpack.c.bf16 %v48, %v48
    %v52 = vpack.c.bf16 %v49, %v49
    %v53 = vpack.c.bf16 %v50, %v50
    %v54 = vld [vmem:[%s2] sm:$0xff]
    %v55 = vld [vmem:[%s2 + $0x8] sm:$0xff]
    %v56 = vld [vmem:[%s2 + $0x10] sm:$0xff]
    %v57 = vld [vmem:[%s2 + $0x18] sm:$0xff]
    %v58 = vld [vmem:[%s2 + $0x20] sm:$0xff]
    %v59 = vld [vmem:[%s2 + $0x28] sm:$0xff]
    %v60 = vld [vmem:[%s2 + $0x30] sm:$0xff]
    %v61 = vld [vmem:[%s2 + $0x38] sm:$0xff]
    %v62 = vld [vmem:[%s2 + $0x40] sm:$0xff]
    %v63 = vld [vmem:[%s2 + $0x48] sm:$0xff]
    %v64 = vld [vmem:[%s2 + $0x50] sm:$0xff]
    %v65 = vld [vmem:[%s2 + $0x58] sm:$0xff]
    %v66 = vld [vmem:[%s2 + $0x60] sm:$0xff]
    %v67 = vld [vmem:[%s2 + $0x68] sm:$0xff]
    %v68 = vld [vmem:[%s2 + $0x70] sm:$0xff]
    %v69 = vld [vmem:[%s2 + $0x78] sm:$0xff]
    %v70 = vld [vmem:[%s2 + $0x80] sm:$0xff]
    %v71 = vld [vmem:[%s2 + $0x88] sm:$0xff]
    %v72 = vld [vmem:[%s2 + $0x90] sm:$0xff]
    %v73 = vld [vmem:[%s2 + $0x98] sm:$0xff]
    %v74 = vld [vmem:[%s2 + $0xa0] sm:$0xff]
    %v75 = vld [vmem:[%s2 + $0xa8] sm:$0xff]
    %v76 = vld [vmem:[%s2 + $0xb0] sm:$0xff]
    %v77 = vld [vmem:[%s2 + $0xb8] sm:$0xff]
    %v78 = vld [vmem:[%s2 + $0xc0] sm:$0xff]
    %v79 = vld [vmem:[%s2 + $0xc8] sm:$0xff]
    %v80 = vld [vmem:[%s2 + $0xd0] sm:$0xff]
    %v81 = vld [vmem:[%s2 + $0xd8] sm:$0xff]
    %v82 = vld [vmem:[%s2 + $0xe0] sm:$0xff]
    %v83 = vld [vmem:[%s2 + $0xe8] sm:$0xff]
    %v84 = vld [vmem:[%s2 + $0xf0] sm:$0xff]
    %v85 = vld [vmem:[%s2 + $0xf8] sm:$0xff]
    %v86 = vld [vmem:[%s2 + $0x100] sm:$0xff]
    %v87 = vld [vmem:[%s2 + $0x108] sm:$0xff]
    %v88 = vld [vmem:[%s2 + $0x110] sm:$0xff]
    %v89 = vld [vmem:[%s2 + $0x118] sm:$0xff]
    %v90 = vld [vmem:[%s2 + $0x120] sm:$0xff]
    %v91 = vld [vmem:[%s2 + $0x128] sm:$0x33]
    %v92 = vld [vmem:[%s12] sm:$0x3]
    %v94 = vperm.slane %v92, 0
    %v95 = vperm.slane %v92, 1
    %v136 = vunpack.c.l.b16 %v54
    %v137 = vunpack.c.h.b16 %v54
    %v138 = vunpack.c.l.b16 %v55
    %v139 = vunpack.c.h.b16 %v55
    %v140 = vunpack.c.l.b16 %v56
    %v141 = vunpack.c.h.b16 %v56
    %v142 = vunpack.c.l.b16 %v57
    %v143 = vunpack.c.h.b16 %v57
    %v144 = vunpack.c.l.b16 %v58
    %v145 = vunpack.c.h.b16 %v58
    %v146 = vunpack.c.l.b16 %v59
    %v147 = vunpack.c.h.b16 %v59
    %v148 = vunpack.c.l.b16 %v60
    %v149 = vunpack.c.h.b16 %v60
    %v150 = vunpack.c.l.b16 %v61
    %v151 = vunpack.c.h.b16 %v61
    %v152 = vunpack.c.l.b16 %v62
    %v153 = vunpack.c.h.b16 %v62
    %v154 = vunpack.c.l.b16 %v63
    %v155 = vunpack.c.h.b16 %v63
    %v156 = vunpack.c.l.b16 %v64
    %v157 = vunpack.c.h.b16 %v64
    %v158 = vunpack.c.l.b16 %v65
    %v159 = vunpack.c.h.b16 %v65
    %v160 = vunpack.c.l.b16 %v66
    %v161 = vunpack.c.h.b16 %v66
    %v162 = vunpack.c.l.b16 %v67
    %v163 = vunpack.c.h.b16 %v67
    %v164 = vunpack.c.l.b16 %v68
    %v165 = vunpack.c.h.b16 %v68
    %v166 = vunpack.c.l.b16 %v69
    %v167 = vunpack.c.h.b16 %v69
    %v168 = vunpack.c.l.b16 %v70
    %v169 = vunpack.c.h.b16 %v70
    %v170 = vunpack.c.l.b16 %v71
    %v171 = vunpack.c.h.b16 %v71
    %v172 = vunpack.c.l.b16 %v72
    %v173 = vunpack.c.h.b16 %v72
    %v174 = vunpack.c.l.b16 %v73
    %v175 = vunpack.c.h.b16 %v73
    %v176 = vunpack.c.l.b16 %v74
    %v177 = vunpack.c.h.b16 %v74
    %v178 = vunpack.c.l.b16 %v75
    %v179 = vunpack.c.h.b16 %v75
    %v180 = vunpack.c.l.b16 %v76
    %v181 = vunpack.c.h.b16 %v76
    %v182 = vunpack.c.l.b16 %v77
    %v183 = vunpack.c.h.b16 %v77
    %v184 = vunpack.c.l.b16 %v78
    %v185 = vunpack.c.h.b16 %v78
    %v186 = vunpack.c.l.b16 %v79
    %v187 = vunpack.c.h.b16 %v79
    %v188 = vunpack.c.l.b16 %v80
    %v189 = vunpack.c.h.b16 %v80
    %v190 = vunpack.c.l.b16 %v81
    %v191 = vunpack.c.h.b16 %v81
    %v192 = vunpack.c.l.b16 %v82
    %v193 = vunpack.c.h.b16 %v82
    %v194 = vunpack.c.l.b16 %v83
    %v195 = vunpack.c.h.b16 %v83
    %v196 = vunpack.c.l.b16 %v84
    %v197 = vunpack.c.h.b16 %v84
    %v198 = vunpack.c.l.b16 %v85
    %v199 = vunpack.c.h.b16 %v85
    %v200 = vunpack.c.l.b16 %v86
    %v201 = vunpack.c.h.b16 %v86
    %v202 = vunpack.c.l.b16 %v87
    %v203 = vunpack.c.h.b16 %v87
    %v204 = vunpack.c.l.b16 %v88
    %v205 = vunpack.c.h.b16 %v88
    %v206 = vunpack.c.l.b16 %v89
    %v207 = vunpack.c.h.b16 %v89
    %v208 = vunpack.c.l.b16 %v90
    %v209 = vunpack.c.h.b16 %v90
    %v210 = vunpack.c.l.b16 %v91
    %v211 = vunpack.c.h.b16 %v91
    %v212 = vpack.c.b16 %v138, %v136
    %v213 = vpack.c.b16 %v139, %v137
    %v214 = vpack.c.b16 %v142, %v140
    %v215 = vpack.c.b16 %v143, %v141
    %v216 = vpack.c.b16 %v146, %v144
    %v217 = vpack.c.b16 %v147, %v145
    %v218 = vpack.c.b16 %v150, %v148
    %v219 = vpack.c.b16 %v151, %v149
    %v220 = vpack.c.b16 %v154, %v152
    %v221 = vpack.c.b16 %v155, %v153
    %v222 = vpack.c.b16 %v158, %v156
    %v223 = vpack.c.b16 %v159, %v157
    %v224 = vpack.c.b16 %v162, %v160
    %v225 = vpack.c.b16 %v163, %v161
    %v226 = vpack.c.b16 %v166, %v164
    %v227 = vpack.c.b16 %v167, %v165
    %v228 = vpack.c.b16 %v170, %v168
    %v229 = vpack.c.b16 %v171, %v169
    %v230 = vpack.c.b16 %v174, %v172
    %v231 = vpack.c.b16 %v175, %v173
    %v232 = vpack.c.b16 %v178, %v176
    %v233 = vpack.c.b16 %v179, %v177
    %v234 = vpack.c.b16 %v182, %v180
    %v235 = vpack.c.b16 %v183, %v181
    %v236 = vpack.c.b16 %v186, %v184
    %v237 = vpack.c.b16 %v187, %v185
    %v238 = vpack.c.b16 %v190, %v188
    %v239 = vpack.c.b16 %v191, %v189
    %v240 = vpack.c.b16 %v194, %v192
    %v241 = vpack.c.b16 %v195, %v193
    %v242 = vpack.c.b16 %v198, %v196
    %v243 = vpack.c.b16 %v199, %v197
    %v244 = vpack.c.b16 %v202, %v200
    %v245 = vpack.c.b16 %v203, %v201
    %v246 = vpack.c.b16 %v206, %v204
    %v247 = vpack.c.b16 %v207, %v205
    %v248 = vpack.c.b16 %v210, %v208
    %v249 = vpack.c.b16 %v211, %v209
    %vm286 = vcmask 359424
    %v288 = vsel %vm286, %v53, 0
    %vm290 = vcmask 1045504
    %v292 = vsel %vm290, %v248, 0
    %v295 = vsel %vm290, %v249, 0
    %297 = vmatpush.bf16.msra.mxu0 %v226
    %298 = vmatpush.bf16.msra.mxu0 %v224
    %299 = vmatpush.bf16.msra.mxu0 %v222
    %300 = vmatpush.bf16.msra.mxu0 %v220
    %301 = vmatpush.bf16.msra.mxu0 %v218
    %302 = vmatpush.bf16.msra.mxu0 %v216
    %303 = vmatpush.bf16.msra.mxu0 %v214
    %304 = vmatpush.bf16.msra.mxu0 %v212
    %305 = vmatmul.bf16.gmra.mxu0 %v51
    %v306 = vpop.f32.mrf.mxu0
    %v307 = vadd.f32 %v94, %v306
    %v308 = vpop.f32.mrf.mxu0
    %309 = vdwg.mxu0
    %310 = vmatpush.bf16.msra.mxu0 %v242
    %311 = vmatpush.bf16.msra.mxu0 %v240
    %312 = vmatpush.bf16.msra.mxu0 %v238
    %313 = vmatpush.bf16.msra.mxu0 %v236
    %314 = vmatpush.bf16.msra.mxu0 %v234
    %315 = vmatpush.bf16.msra.mxu0 %v232
    %316 = vmatpush.bf16.msra.mxu0 %v230
    %317 = vmatpush.bf16.msra.mxu0 %v228
    %318 = vmatmul.bf16.gmra.mxu0 %v52
    %v319 = vpop.f32.mrf.mxu0
    %v320 = vadd.f32 %v307, %v319
    %v321 = vpop.f32.mrf.mxu0
    %322 = vdwg.mxu0
    %323 = vmatpush.bf16.msra.mxu0 0
    %324 = vmatpush.bf16.msra.mxu0 0
    %325 = vmatpush.bf16.msra.mxu0 0
    %326 = vmatpush.bf16.msra.mxu0 0
    %327 = vmatpush.bf16.msra.mxu0 0
    %328 = vmatpush.bf16.msra.mxu0 %v292
    %329 = vmatpush.bf16.msra.mxu0 %v246
    %330 = vmatpush.bf16.msra.mxu0 %v244
    %331 = vmatmul.bf16.gmra.mxu0 %v288
    %v332 = vpop.f32.mrf.mxu0
    %v333 = vadd.f32 %v320, %v332
    %v334 = vpop.f32.mrf.mxu0
    %335 = vdwg.mxu0
    %336 = vmatpush.bf16.msra.mxu0 %v227
    %337 = vmatpush.bf16.msra.mxu0 %v225
    %338 = vmatpush.bf16.msra.mxu0 %v223
    %339 = vmatpush.bf16.msra.mxu0 %v221
    %340 = vmatpush.bf16.msra.mxu0 %v219
    %341 = vmatpush.bf16.msra.mxu0 %v217
    %342 = vmatpush.bf16.msra.mxu0 %v215
    %343 = vmatpush.bf16.msra.mxu0 %v213
    %344 = vmatmul.bf16.gmra.mxu0 %v51
    %v345 = vpop.f32.mrf.mxu0
    %v346 = vadd.f32 %v95, %v345
    %v347 = vpop.f32.mrf.mxu0
    %348 = vdwg.mxu0
    %349 = vmatpush.bf16.msra.mxu0 %v243
    %350 = vmatpush.bf16.msra.mxu0 %v241
    %351 = vmatpush.bf16.msra.mxu0 %v239
    %352 = vmatpush.bf16.msra.mxu0 %v237
    %353 = vmatpush.bf16.msra.mxu0 %v235
    %354 = vmatpush.bf16.msra.mxu0 %v233
    %355 = vmatpush.bf16.msra.mxu0 %v231
    %356 = vmatpush.bf16.msra.mxu0 %v229
    %357 = vmatmul.bf16.gmra.mxu0 %v52
    %v358 = vpop.f32.mrf.mxu0
    %v359 = vadd.f32 %v346, %v358
    %v360 = vpop.f32.mrf.mxu0
    %361 = vdwg.mxu0
    %362 = vmatpush.bf16.msra.mxu0 0
    %363 = vmatpush.bf16.msra.mxu0 0
    %364 = vmatpush.bf16.msra.mxu0 0
    %365 = vmatpush.bf16.msra.mxu0 0
    %366 = vmatpush.bf16.msra.mxu0 0
    %367 = vmatpush.bf16.msra.mxu0 %v295
    %368 = vmatpush.bf16.msra.mxu0 %v247
    %369 = vmatpush.bf16.msra.mxu0 %v245
    %370 = vmatmul.bf16.gmra.mxu0 %v288
    %v371 = vpop.f32.mrf.mxu0
    %v372 = vadd.f32 %v359, %v371
    %v373 = vpop.f32.mrf.mxu0
    %374 = vdwg.mxu0
    %v375 = vmax.f32 %v333, 0.0
    %v376 = vmax.f32 %v372, 0.0
    %v377 = vpack.c.bf16 %v375, %v375
    %v378 = vpack.c.bf16 %v376, %v376
    %v379 = vld [vmem:[%s3] sm:$0xf]
    %v380 = vld [vmem:[%s3 + $0x4] sm:$0xf]
    %v381 = vld [vmem:[%s3 + $0x8] sm:$0xf]
    %v382 = vld [vmem:[%s3 + $0xc] sm:$0xf]
    %v383 = vld [vmem:[%s3 + $0x10] sm:$0xf]
    %v384 = vld [vmem:[%s3 + $0x14] sm:$0xf]
    %v385 = vld [vmem:[%s3 + $0x18] sm:$0xf]
    %v386 = vld [vmem:[%s3 + $0x1c] sm:$0xf]
    %v387 = vld [vmem:[%s3 + $0x20] sm:$0xf]
    %v388 = vld [vmem:[%s3 + $0x24] sm:$0xf]
    %v389 = vld [vmem:[%s3 + $0x28] sm:$0xf]
    %v390 = vld [vmem:[%s3 + $0x2c] sm:$0xf]
    %v391 = vld [vmem:[%s3 + $0x30] sm:$0xf]
    %v392 = vld [vmem:[%s3 + $0x34] sm:$0xf]
    %v393 = vld [vmem:[%s3 + $0x38] sm:$0xf]
    %v394 = vld [vmem:[%s3 + $0x3c] sm:$0xf]
    %v395 = vld [vmem:[%s3 + $0x40] sm:$0xf]
    %v396 = vld [vmem:[%s3 + $0x44] sm:$0xf]
    %v397 = vld [vmem:[%s3 + $0x48] sm:$0xf]
    %v398 = vld [vmem:[%s3 + $0x4c] sm:$0xf]
    %v399 = vld [vmem:[%s3 + $0x50] sm:$0xf]
    %v400 = vld [vmem:[%s3 + $0x54] sm:$0xf]
    %v401 = vld [vmem:[%s3 + $0x58] sm:$0xf]
    %v402 = vld [vmem:[%s3 + $0x5c] sm:$0xf]
    %v403 = vld [vmem:[%s3 + $0x60] sm:$0xf]
    %v404 = vld [vmem:[%s12 + $0x2] sm:$0x1]
    %v406 = vperm.slane %v404, 0
    %v433 = vunpack.c.l.b16 %v379
    %v434 = vunpack.c.l.b16 %v380
    %v435 = vunpack.c.l.b16 %v381
    %v436 = vunpack.c.l.b16 %v382
    %v437 = vunpack.c.l.b16 %v383
    %v438 = vunpack.c.l.b16 %v384
    %v439 = vunpack.c.l.b16 %v385
    %v440 = vunpack.c.l.b16 %v386
    %v441 = vunpack.c.l.b16 %v387
    %v442 = vunpack.c.l.b16 %v388
    %v443 = vunpack.c.l.b16 %v389
    %v444 = vunpack.c.l.b16 %v390
    %v445 = vunpack.c.l.b16 %v391
    %v446 = vunpack.c.l.b16 %v392
    %v447 = vunpack.c.l.b16 %v393
    %v448 = vunpack.c.l.b16 %v394
    %v449 = vunpack.c.l.b16 %v395
    %v450 = vunpack.c.l.b16 %v396
    %v451 = vunpack.c.l.b16 %v397
    %v452 = vunpack.c.l.b16 %v398
    %v453 = vunpack.c.l.b16 %v399
    %v454 = vunpack.c.l.b16 %v400
    %v455 = vunpack.c.l.b16 %v401
    %v456 = vunpack.c.l.b16 %v402
    %v457 = vunpack.c.l.b16 %v403
    %v458 = vpack.c.b16 %v434, %v433
    %v459 = vpack.c.b16 %v436, %v435
    %v460 = vpack.c.b16 %v438, %v437
    %v461 = vpack.c.b16 %v440, %v439
    %v462 = vpack.c.b16 %v442, %v441
    %v463 = vpack.c.b16 %v444, %v443
    %v464 = vpack.c.b16 %v446, %v445
    %v465 = vpack.c.b16 %v448, %v447
    %v466 = vpack.c.b16 %v450, %v449
    %v467 = vpack.c.b16 %v452, %v451
    %v468 = vpack.c.b16 %v454, %v453
    %v469 = vpack.c.b16 %v456, %v455
    %v470 = vpack.c.b16 %v457, %v457
    %vm483 = vcmask 588800
    %v485 = vsel %vm483, %v378, 0
    %vm487 = vcmask 1043456
    %v489 = vsel %vm487, %v470, 0
    %491 = vmatpush.bf16.msra.mxu0 %v465
    %492 = vmatpush.bf16.msra.mxu0 %v464
    %493 = vmatpush.bf16.msra.mxu0 %v463
    %494 = vmatpush.bf16.msra.mxu0 %v462
    %495 = vmatpush.bf16.msra.mxu0 %v461
    %496 = vmatpush.bf16.msra.mxu0 %v460
    %497 = vmatpush.bf16.msra.mxu0 %v459
    %498 = vmatpush.bf16.msra.mxu0 %v458
    %499 = vmatmul.bf16.gmra.mxu0 %v377
    %v500 = vpop.f32.mrf.mxu0
    %v501 = vadd.f32 %v406, %v500
    %v502 = vpop.f32.mrf.mxu0
    %503 = vdwg.mxu0
    %504 = vmatpush.bf16.msra.mxu0 0
    %505 = vmatpush.bf16.msra.mxu0 0
    %506 = vmatpush.bf16.msra.mxu0 0
    %507 = vmatpush.bf16.msra.mxu0 %v489
    %508 = vmatpush.bf16.msra.mxu0 %v469
    %509 = vmatpush.bf16.msra.mxu0 %v468
    %510 = vmatpush.bf16.msra.mxu0 %v467
    %511 = vmatpush.bf16.msra.mxu0 %v466
    %512 = vmatmul.bf16.gmra.mxu0 %v485
    %v513 = vpop.f32.mrf.mxu0
    %v514 = vadd.f32 %v501, %v513
    %v515 = vpop.f32.mrf.mxu0
    %516 = vdwg.mxu0
    %v517 = vmax.f32 %v514, 0.0
    %v518 = vpack.c.bf16 %v517, %v517
    %v519 = vld [vmem:[%s4] sm:$0xf]
    %v520 = vld [vmem:[%s4 + $0x4] sm:$0xf]
    %v521 = vld [vmem:[%s4 + $0x8] sm:$0xf]
    %v522 = vld [vmem:[%s4 + $0xc] sm:$0xf]
    %v523 = vld [vmem:[%s4 + $0x10] sm:$0xf]
    %v524 = vld [vmem:[%s4 + $0x14] sm:$0xf]
    %v525 = vld [vmem:[%s4 + $0x18] sm:$0xf]
    %v526 = vld [vmem:[%s4 + $0x1c] sm:$0xf]
    %v527 = vld [vmem:[%s4 + $0x20] sm:$0xf]
    %v528 = vld [vmem:[%s4 + $0x24] sm:$0xf]
    %v529 = vld [vmem:[%s4 + $0x28] sm:$0xf]
    %v530 = vld [vmem:[%s4 + $0x2c] sm:$0xf]
    %v531 = vld [vmem:[%s4 + $0x30] sm:$0x3]
    %v532 = vld [vmem:[%s12 + $0x3] sm:$0x1]
    %v534 = vperm.slane %v532, 0
    %v549 = vunpack.c.l.b16 %v519
    %v550 = vunpack.c.l.b16 %v520
    %v551 = vunpack.c.l.b16 %v521
    %v552 = vunpack.c.l.b16 %v522
    %v553 = vunpack.c.l.b16 %v523
    %v554 = vunpack.c.l.b16 %v524
    %v555 = vunpack.c.l.b16 %v525
    %v556 = vunpack.c.l.b16 %v526
    %v557 = vunpack.c.l.b16 %v527
    %v558 = vunpack.c.l.b16 %v528
    %v559 = vunpack.c.l.b16 %v529
    %v560 = vunpack.c.l.b16 %v530
    %v561 = vunpack.c.l.b16 %v531
    %v562 = vpack.c.b16 %v550, %v549
    %v563 = vpack.c.b16 %v552, %v551
    %v564 = vpack.c.b16 %v554, %v553
    %v565 = vpack.c.b16 %v556, %v555
    %v566 = vpack.c.b16 %v558, %v557
    %v567 = vpack.c.b16 %v560, %v559
    %v568 = vpack.c.b16 %v561, %v561
    %vm575 = vcmask 818176
    %v577 = vsel %vm575, %v518, 0
    %vm579 = vcmask 1041408
    %v581 = vsel %vm579, %v568, 0
    %583 = vmatpush.bf16.msra.mxu0 0
    %584 = vmatpush.bf16.msra.mxu0 %v581
    %585 = vmatpush.bf16.msra.mxu0 %v567
    %586 = vmatpush.bf16.msra.mxu0 %v566
    %587 = vmatpush.bf16.msra.mxu0 %v565
    %588 = vmatpush.bf16.msra.mxu0 %v564
    %589 = vmatpush.bf16.msra.mxu0 %v563
    %590 = vmatpush.bf16.msra.mxu0 %v562
    %591 = vmatmul.bf16.gmra.mxu0 %v577
    %v592 = vpop.f32.mrf.mxu0
    %v593 = vadd.f32 %v534, %v592
    %v594 = vpop.f32.mrf.mxu0
    %595 = vdwg.mxu0
    %v596 = vmax.f32 %v593, 0.0
    %v597 = vpack.c.bf16 %v596, %v596
    %v598 = vld [vmem:[%s5] sm:$0xf]
    %v599 = vld [vmem:[%s5 + $0x4] sm:$0xf]
    %v600 = vld [vmem:[%s5 + $0x8] sm:$0xf]
    %v601 = vld [vmem:[%s5 + $0xc] sm:$0xf]
    %v602 = vld [vmem:[%s5 + $0x10] sm:$0xf]
    %v603 = vld [vmem:[%s5 + $0x14] sm:$0xf]
    %v604 = vld [vmem:[%s5 + $0x18] sm:$0xf]
    %v605 = vld [vmem:[%s5 + $0x1c] sm:$0xf]
    %v606 = vld [vmem:[%s5 + $0x20] sm:$0xf]
    %v607 = vld [vmem:[%s5 + $0x24] sm:$0xf]
    %v608 = vld [vmem:[%s12 + $0x4] sm:$0x1]
    %v610 = vperm.slane %v608, 0
    %v622 = vunpack.c.l.b16 %v598
    %v623 = vunpack.c.l.b16 %v599
    %v624 = vunpack.c.l.b16 %v600
    %v625 = vunpack.c.l.b16 %v601
    %v626 = vunpack.c.l.b16 %v602
    %v627 = vunpack.c.l.b16 %v603
    %v628 = vunpack.c.l.b16 %v604
    %v629 = vunpack.c.l.b16 %v605
    %v630 = vunpack.c.l.b16 %v606
    %v631 = vunpack.c.l.b16 %v607
    %v632 = vpack.c.b16 %v623, %v622
    %v633 = vpack.c.b16 %v625, %v624
    %v634 = vpack.c.b16 %v627, %v626
    %v635 = vpack.c.b16 %v629, %v628
    %v636 = vpack.c.b16 %v631, %v630
    %vm642 = vcmask 654336
    %v644 = vsel %vm642, %v597, 0
    %646 = vmatpush.bf16.msra.mxu0 0
    %647 = vmatpush.bf16.msra.mxu0 0
    %648 = vmatpush.bf16.msra.mxu0 0
    %649 = vmatpush.bf16.msra.mxu0 %v636
    %650 = vmatpush.bf16.msra.mxu0 %v635
    %651 = vmatpush.bf16.msra.mxu0 %v634
    %652 = vmatpush.bf16.msra.mxu0 %v633
    %653 = vmatpush.bf16.msra.mxu0 %v632
    %654 = vmatmul.bf16.gmra.mxu0 %v644
    %v655 = vpop.f32.mrf.mxu0
    %v656 = vadd.f32 %v610, %v655
    %v657 = vpop.f32.mrf.mxu0
    %658 = vdwg.mxu0
    %v659 = vmax.f32 %v656, 0.0
    %v660 = vpack.c.bf16 %v659, %v659
    %v661 = vld [vmem:[%s6] sm:$0xf]
    %v662 = vld [vmem:[%s6 + $0x4] sm:$0xf]
    %v663 = vld [vmem:[%s6 + $0x8] sm:$0xf]
    %v664 = vld [vmem:[%s6 + $0xc] sm:$0xf]
    %v665 = vld [vmem:[%s6 + $0x10] sm:$0xf]
    %v666 = vld [vmem:[%s12 + $0x5] sm:$0x1]
    %v668 = vperm.slane %v666, 0
    %v675 = vunpack.c.l.b16 %v661
    %v676 = vunpack.c.l.b16 %v662
    %v677 = vunpack.c.l.b16 %v663
    %v678 = vunpack.c.l.b16 %v664
    %v679 = vunpack.c.l.b16 %v665
    %v680 = vpack.c.b16 %v676, %v675
    %v681 = vpack.c.b16 %v678, %v677
    %v682 = vpack.c.b16 %v679, %v679
    %vm685 = vcmask 326656
    %v687 = vsel %vm685, %v660, 0
    %v690 = vsel %vm487, %v682, 0
    %692 = vmatpush.bf16.msra.mxu0 0
    %693 = vmatpush.bf16.msra.mxu0 0
    %694 = vmatpush.bf16.msra.mxu0 0
    %695 = vmatpush.bf16.msra.mxu0 0
    %696 = vmatpush.bf16.msra.mxu0 0
    %697 = vmatpush.bf16.msra.mxu0 %v690
    %698 = vmatpush.bf16.msra.mxu0 %v681
    %699 = vmatpush.bf16.msra.mxu0 %v680
    %700 = vmatmul.bf16.gmra.mxu0 %v687
    %v701 = vpop.f32.mrf.mxu0
    %v702 = vadd.f32 %v668, %v701
    %v703 = vpop.f32.mrf.mxu0
    %704 = vdwg.mxu0
    %v705 = vmul.f32 %v702, 1.442695
    %v706 = vpow.pop %v705
    %v707 = vmul.f32 %v706, 0.5
    %v708 = vld [vmem:[%s1] sm:$0xff]
    %710 = vrot.lane.b32.xlu0 %v707, 116
    %v711 = vpop.permute.xlu0 %710
    %v713 = vmul.f32 %v708, %v711
    %v714 = vadd.f32 %v713, %v702
    %v715 = vpack.c.bf16 %v714, %v714
    %v716 = vld [vmem:[%s7] sm:$0xf]
    %v717 = vld [vmem:[%s7 + $0x4] sm:$0x3]
    %v718 = vld [vmem:[%s12 + $0x6] sm:$0x1]
    %v720 = vperm.slane %v718, 0
    %v724 = vunpack.c.l.b16 %v716
    %v725 = vunpack.c.l.b16 %v717
    %v726 = vpack.c.b16 %v725, %v724
    %vm727 = vcmask 97280
    %v729 = vsel %vm727, %v715, 0
    %v732 = vsel %vm290, %v726, 0
    %734 = vmatpush.bf16.msra.mxu0 0
    %735 = vmatpush.bf16.msra.mxu0 0
    %736 = vmatpush.bf16.msra.mxu0 0
    %737 = vmatpush.bf16.msra.mxu0 0
    %738 = vmatpush.bf16.msra.mxu0 0
    %739 = vmatpush.bf16.msra.mxu0 0
    %740 = vmatpush.bf16.msra.mxu0 0
    %741 = vmatpush.bf16.msra.mxu0 %v732
    %742 = vmatmul.bf16.gmra.mxu0 %v729
    %v743 = vpop.f32.mrf.mxu0
    %v744 = vadd.f32 %v720, %v743
    %v745 = vpop.f32.mrf.mxu0
    %746 = vdwg.mxu0
    %v747 = vmax.f32 %v744, 0.0
    %v748 = vpack.c.bf16 %v747, %v747
    %v749 = vld [vmem:[%s8] sm:$0xf]
    %v750 = vld [vmem:[%s8 + $0x4] sm:$0xf]
    %v751 = vld [vmem:[%s8 + $0x8] sm:$0xf]
    %v752 = vld [vmem:[%s8 + $0xc] sm:$0xf]
    %v753 = vld [vmem:[%s8 + $0x10] sm:$0xf]
    %v754 = vld [vmem:[%s12 + $0x7] sm:$0x1]
    %v756 = vperm.slane %v754, 0
    %v763 = vunpack.c.l.b16 %v749
    %v764 = vunpack.c.l.b16 %v750
    %v765 = vunpack.c.l.b16 %v751
    %v766 = vunpack.c.l.b16 %v752
    %v767 = vunpack.c.l.b16 %v753
    %v768 = vpack.c.b16 %v764, %v763
    %v769 = vpack.c.b16 %v766, %v765
    %v770 = vpack.c.b16 %v767, %v767
    %v774 = vsel %vm685, %v748, 0
    %v777 = vsel %vm487, %v770, 0
    %779 = vmatpush.bf16.msra.mxu0 0
    %780 = vmatpush.bf16.msra.mxu0 0
    %781 = vmatpush.bf16.msra.mxu0 0
    %782 = vmatpush.bf16.msra.mxu0 0
    %783 = vmatpush.bf16.msra.mxu0 0
    %784 = vmatpush.bf16.msra.mxu0 %v777
    %785 = vmatpush.bf16.msra.mxu0 %v769
    %786 = vmatpush.bf16.msra.mxu0 %v768
    %787 = vmatmul.bf16.gmra.mxu0 %v774
    %v788 = vpop.f32.mrf.mxu0
    %v789 = vadd.f32 %v756, %v788
    %v790 = vpop.f32.mrf.mxu0
    %791 = vdwg.mxu0
    %v792 = vmax.f32 %v789, 0.0
    %v793 = vpack.c.bf16 %v792, %v792
    %v794 = vld [vmem:[%s9] sm:$0xf]
    %v795 = vld [vmem:[%s9 + $0x4] sm:$0xf]
    %v796 = vld [vmem:[%s9 + $0x8] sm:$0xf]
    %v797 = vld [vmem:[%s9 + $0xc] sm:$0xf]
    %v798 = vld [vmem:[%s9 + $0x10] sm:$0xf]
    %v799 = vld [vmem:[%s9 + $0x14] sm:$0xf]
    %v800 = vld [vmem:[%s9 + $0x18] sm:$0xf]
    %v801 = vld [vmem:[%s9 + $0x1c] sm:$0xf]
    %v802 = vld [vmem:[%s9 + $0x20] sm:$0xf]
    %v803 = vld [vmem:[%s9 + $0x24] sm:$0xf]
    %v804 = vld [vmem:[%s12 + $0x8] sm:$0x1]
    %v806 = vperm.slane %v804, 0
    %v818 = vunpack.c.l.b16 %v794
    %v819 = vunpack.c.l.b16 %v795
    %v820 = vunpack.c.l.b16 %v796
    %v821 = vunpack.c.l.b16 %v797
    %v822 = vunpack.c.l.b16 %v798
    %v823 = vunpack.c.l.b16 %v799
    %v824 = vunpack.c.l.b16 %v800
    %v825 = vunpack.c.l.b16 %v801
    %v826 = vunpack.c.l.b16 %v802
    %v827 = vunpack.c.l.b16 %v803
    %v828 = vpack.c.b16 %v819, %v818
    %v829 = vpack.c.b16 %v821, %v820
    %v830 = vpack.c.b16 %v823, %v822
    %v831 = vpack.c.b16 %v825, %v824
    %v832 = vpack.c.b16 %v827, %v826
    %v839 = vsel %vm642, %v793, 0
    %841 = vmatpush.bf16.msra.mxu0 0
    %842 = vmatpush.bf16.msra.mxu0 0
    %843 = vmatpush.bf16.msra.mxu0 0
    %844 = vmatpush.bf16.msra.mxu0 %v832
    %845 = vmatpush.bf16.msra.mxu0 %v831
    %846 = vmatpush.bf16.msra.mxu0 %v830
    %847 = vmatpush.bf16.msra.mxu0 %v829
    %848 = vmatpush.bf16.msra.mxu0 %v828
    %849 = vmatmul.bf16.gmra.mxu0 %v839
    %v850 = vpop.f32.mrf.mxu0
    %v851 = vadd.f32 %v806, %v850
    %v852 = vpop.f32.mrf.mxu0
    %853 = vdwg.mxu0
    %v854 = vmax.f32 %v851, 0.0
    %v855 = vpack.c.bf16 %v854, %v854
    %v856 = vld [vmem:[%s10] sm:$0xff]
    %v857 = vld [vmem:[%s10 + $0x8] sm:$0xff]
    %v858 = vld [vmem:[%s10 + $0x10] sm:$0xff]
    %v859 = vld [vmem:[%s10 + $0x18] sm:$0xff]
    %v860 = vld [vmem:[%s10 + $0x20] sm:$0xff]
    %v861 = vld [vmem:[%s10 + $0x28] sm:$0xff]
    %v862 = vld [vmem:[%s10 + $0x30] sm:$0xff]
    %v863 = vld [vmem:[%s10 + $0x38] sm:$0xff]
    %v864 = vld [vmem:[%s10 + $0x40] sm:$0xff]
    %v865 = vld [vmem:[%s10 + $0x48] sm:$0xff]
    %v866 = vld [vmem:[%s10 + $0x50] sm:$0xff]
    %v867 = vld [vmem:[%s10 + $0x58] sm:$0xff]
    %v868 = vld [vmem:[%s10 + $0x60] sm:$0x33]
    %v869 = vld [vmem:[%s12 + $0x9] sm:$0x3]
    %v871 = vperm.slane %v869, 0
    %v872 = vperm.slane %v869, 1
    %v888 = vunpack.c.l.b16 %v856
    %v889 = vunpack.c.h.b16 %v856
    %v890 = vunpack.c.l.b16 %v857
    %v891 = vunpack.c.h.b16 %v857
    %v892 = vunpack.c.l.b16 %v858
    %v893 = vunpack.c.h.b16 %v858
    %v894 = vunpack.c.l.b16 %v859
    %v895 = vunpack.c.h.b16 %v859
    %v896 = vunpack.c.l.b16 %v860
    %v897 = vunpack.c.h.b16 %v860
    %v898 = vunpack.c.l.b16 %v861
    %v899 = vunpack.c.h.b16 %v861
    %v900 = vunpack.c.l.b16 %v862
    %v901 = vunpack.c.h.b16 %v862
    %v902 = vunpack.c.l.b16 %v863
    %v903 = vunpack.c.h.b16 %v863
    %v904 = vunpack.c.l.b16 %v864
    %v905 = vunpack.c.h.b16 %v864
    %v906 = vunpack.c.l.b16 %v865
    %v907 = vunpack.c.h.b16 %v865
    %v908 = vunpack.c.l.b16 %v866
    %v909 = vunpack.c.h.b16 %v866
    %v910 = vunpack.c.l.b16 %v867
    %v911 = vunpack.c.h.b16 %v867
    %v912 = vunpack.c.l.b16 %v868
    %v913 = vunpack.c.h.b16 %v868
    %v914 = vpack.c.b16 %v890, %v888
    %v915 = vpack.c.b16 %v891, %v889
    %v916 = vpack.c.b16 %v894, %v892
    %v917 = vpack.c.b16 %v895, %v893
    %v918 = vpack.c.b16 %v898, %v896
    %v919 = vpack.c.b16 %v899, %v897
    %v920 = vpack.c.b16 %v902, %v900
    %v921 = vpack.c.b16 %v903, %v901
    %v922 = vpack.c.b16 %v906, %v904
    %v923 = vpack.c.b16 %v907, %v905
    %v924 = vpack.c.b16 %v910, %v908
    %v925 = vpack.c.b16 %v911, %v909
    %v926 = vpack.c.b16 %v912, %v912
    %v927 = vpack.c.b16 %v913, %v913
    %v941 = vsel %vm575, %v855, 0
    %v944 = vsel %vm579, %v926, 0
    %v947 = vsel %vm579, %v927, 0
    %949 = vmatpush.bf16.msra.mxu0 0
    %950 = vmatpush.bf16.msra.mxu0 %v944
    %951 = vmatpush.bf16.msra.mxu0 %v924
    %952 = vmatpush.bf16.msra.mxu0 %v922
    %953 = vmatpush.bf16.msra.mxu0 %v920
    %954 = vmatpush.bf16.msra.mxu0 %v918
    %955 = vmatpush.bf16.msra.mxu0 %v916
    %956 = vmatpush.bf16.msra.mxu0 %v914
    %957 = vmatmul.bf16.gmra.mxu0 %v941
    %v958 = vpop.f32.mrf.mxu0
    %v959 = vadd.f32 %v871, %v958
    %v960 = vpop.f32.mrf.mxu0
    %961 = vdwg.mxu0
    %962 = vmatpush.bf16.msra.mxu0 0
    %963 = vmatpush.bf16.msra.mxu0 %v947
    %964 = vmatpush.bf16.msra.mxu0 %v925
    %965 = vmatpush.bf16.msra.mxu0 %v923
    %966 = vmatpush.bf16.msra.mxu0 %v921
    %967 = vmatpush.bf16.msra.mxu0 %v919
    %968 = vmatpush.bf16.msra.mxu0 %v917
    %969 = vmatpush.bf16.msra.mxu0 %v915
    %970 = vmatmul.bf16.gmra.mxu0 %v941
    %v971 = vpop.f32.mrf.mxu0
    %v972 = vadd.f32 %v872, %v971
    %v973 = vpop.f32.mrf.mxu0
    %974 = vdwg.mxu0
    %v975 = vmax.f32 %v959, 0.0
    %v976 = vmax.f32 %v972, 0.0
    %v977 = vpack.c.bf16 %v975, %v975
    %v978 = vpack.c.bf16 %v976, %v976
    %v979 = vld [vmem:[%s11] sm:$0xff]
    %v980 = vld [vmem:[%s11 + $0x8] sm:$0xf]
    %v981 = vld [vmem:[%s11 + $0xc] sm:$0xff]
    %v982 = vld [vmem:[%s11 + $0x14] sm:$0xf]
    %v983 = vld [vmem:[%s11 + $0x18] sm:$0xff]
    %v984 = vld [vmem:[%s11 + $0x20] sm:$0xf]
    %v985 = vld [vmem:[%s11 + $0x24] sm:$0xff]
    %v986 = vld [vmem:[%s11 + $0x2c] sm:$0xf]
    %v987 = vld [vmem:[%s11 + $0x30] sm:$0xff]
    %v988 = vld [vmem:[%s11 + $0x38] sm:$0xf]
    %v989 = vld [vmem:[%s11 + $0x3c] sm:$0xff]
    %v990 = vld [vmem:[%s11 + $0x44] sm:$0xf]
    %v991 = vld [vmem:[%s11 + $0x48] sm:$0xff]
    %v992 = vld [vmem:[%s11 + $0x50] sm:$0xf]
    %v993 = vld [vmem:[%s11 + $0x54] sm:$0xff]
    %v994 = vld [vmem:[%s11 + $0x5c] sm:$0xf]
    %v995 = vld [vmem:[%s11 + $0x60] sm:$0xff]
    %v996 = vld [vmem:[%s11 + $0x68] sm:$0xf]
    %v997 = vld [vmem:[%s11 + $0x6c] sm:$0xff]
    %v998 = vld [vmem:[%s11 + $0x74] sm:$0xf]
    %v999 = vld [vmem:[%s11 + $0x78] sm:$0xff]
    %v1000 = vld [vmem:[%s11 + $0x80] sm:$0xf]
    %v1001 = vld [vmem:[%s11 + $0x84] sm:$0xff]
    %v1002 = vld [vmem:[%s11 + $0x8c] sm:$0xf]
    %v1003 = vld [vmem:[%s11 + $0x90] sm:$0xff]
    %v1004 = vld [vmem:[%s11 + $0x98] sm:$0xf]
    %v1005 = vld [vmem:[%s11 + $0x9c] sm:$0xff]
    %v1006 = vld [vmem:[%s11 + $0xa4] sm:$0xf]
    %v1007 = vld [vmem:[%s11 + $0xa8] sm:$0xff]
    %v1008 = vld [vmem:[%s11 + $0xb0] sm:$0xf]
    %v1009 = vld [vmem:[%s11 + $0xb4] sm:$0xff]
    %v1010 = vld [vmem:[%s11 + $0xbc] sm:$0xf]
    %v1011 = vld [vmem:[%s11 + $0xc0] sm:$0xff]
    %v1012 = vld [vmem:[%s11 + $0xc8] sm:$0xf]
    %v1013 = vld [vmem:[%s11 + $0xcc] sm:$0xff]
    %v1014 = vld [vmem:[%s11 + $0xd4] sm:$0xf]
    %v1015 = vld [vmem:[%s11 + $0xd8] sm:$0xff]
    %v1016 = vld [vmem:[%s11 + $0xe0] sm:$0xf]
    %v1017 = vld [vmem:[%s11 + $0xe4] sm:$0xff]
    %v1018 = vld [vmem:[%s11 + $0xec] sm:$0xf]
    %v1019 = vld [vmem:[%s11 + $0xf0] sm:$0xff]
    %v1020 = vld [vmem:[%s11 + $0xf8] sm:$0xf]
    %v1021 = vld [vmem:[%s11 + $0xfc] sm:$0xff]
    %v1022 = vld [vmem:[%s11 + $0x104] sm:$0xf]
    %v1023 = vld [vmem:[%s11 + $0x108] sm:$0xff]
    %v1024 = vld [vmem:[%s11 + $0x110] sm:$0xf]
    %v1025 = vld [vmem:[%s11 + $0x114] sm:$0xff]
    %v1026 = vld [vmem:[%s11 + $0x11c] sm:$0xf]
    %v1027 = vld [vmem:[%s11 + $0x120] sm:$0xff]
    %v1028 = vld [vmem:[%s11 + $0x128] sm:$0xf]
    %v1029 = vld [vmem:[%s12 + $0xb] sm:$0x7]
    %v1031 = vperm.slane %v1029, 0
    %v1032 = vperm.slane %v1029, 1
    %v1033 = vperm.slane %v1029, 2
    %v1087 = vunpack.c.l.b16 %v979
    %v1088 = vunpack.c.h.b16 %v979
    %v1089 = vunpack.c.l.b16 %v980
    %v1090 = vunpack.c.l.b16 %v981
    %v1091 = vunpack.c.h.b16 %v981
    %v1092 = vunpack.c.l.b16 %v982
    %v1093 = vunpack.c.l.b16 %v983
    %v1094 = vunpack.c.h.b16 %v983
    %v1095 = vunpack.c.l.b16 %v984
    %v1096 = vunpack.c.l.b16 %v985
    %v1097 = vunpack.c.h.b16 %v985
    %v1098 = vunpack.c.l.b16 %v986
    %v1099 = vunpack.c.l.b16 %v987
    %v1100 = vunpack.c.h.b16 %v987
    %v1101 = vunpack.c.l.b16 %v988
    %v1102 = vunpack.c.l.b16 %v989
    %v1103 = vunpack.c.h.b16 %v989
    %v1104 = vunpack.c.l.b16 %v990
    %v1105 = vunpack.c.l.b16 %v991
    %v1106 = vunpack.c.h.b16 %v991
    %v1107 = vunpack.c.l.b16 %v992
    %v1108 = vunpack.c.l.b16 %v993
    %v1109 = vunpack.c.h.b16 %v993
    %v1110 = vunpack.c.l.b16 %v994
    %v1111 = vunpack.c.l.b16 %v995
    %v1112 = vunpack.c.h.b16 %v995
    %v1113 = vunpack.c.l.b16 %v996
    %v1114 = vunpack.c.l.b16 %v997
    %v1115 = vunpack.c.h.b16 %v997
    %v1116 = vunpack.c.l.b16 %v998
    %v1117 = vunpack.c.l.b16 %v999
    %v1118 = vunpack.c.h.b16 %v999
    %v1119 = vunpack.c.l.b16 %v1000
    %v1120 = vunpack.c.l.b16 %v1001
    %v1121 = vunpack.c.h.b16 %v1001
    %v1122 = vunpack.c.l.b16 %v1002
    %v1123 = vunpack.c.l.b16 %v1003
    %v1124 = vunpack.c.h.b16 %v1003
    %v1125 = vunpack.c.l.b16 %v1004
    %v1126 = vunpack.c.l.b16 %v1005
    %v1127 = vunpack.c.h.b16 %v1005
    %v1128 = vunpack.c.l.b16 %v1006
    %v1129 = vunpack.c.l.b16 %v1007
    %v1130 = vunpack.c.h.b16 %v1007
    %v1131 = vunpack.c.l.b16 %v1008
    %v1132 = vunpack.c.l.b16 %v1009
    %v1133 = vunpack.c.h.b16 %v1009
    %v1134 = vunpack.c.l.b16 %v1010
    %v1135 = vunpack.c.l.b16 %v1011
    %v1136 = vunpack.c.h.b16 %v1011
    %v1137 = vunpack.c.l.b16 %v1012
    %v1138 = vunpack.c.l.b16 %v1013
    %v1139 = vunpack.c.h.b16 %v1013
    %v1140 = vunpack.c.l.b16 %v1014
    %v1141 = vunpack.c.l.b16 %v1015
    %v1142 = vunpack.c.h.b16 %v1015
    %v1143 = vunpack.c.l.b16 %v1016
    %v1144 = vunpack.c.l.b16 %v1017
    %v1145 = vunpack.c.h.b16 %v1017
    %v1146 = vunpack.c.l.b16 %v1018
    %v1147 = vunpack.c.l.b16 %v1019
    %v1148 = vunpack.c.h.b16 %v1019
    %v1149 = vunpack.c.l.b16 %v1020
    %v1150 = vunpack.c.l.b16 %v1021
    %v1151 = vunpack.c.h.b16 %v1021
    %v1152 = vunpack.c.l.b16 %v1022
    %v1153 = vunpack.c.l.b16 %v1023
    %v1154 = vunpack.c.h.b16 %v1023
    %v1155 = vunpack.c.l.b16 %v1024
    %v1156 = vunpack.c.l.b16 %v1025
    %v1157 = vunpack.c.h.b16 %v1025
    %v1158 = vunpack.c.l.b16 %v1026
    %v1159 = vunpack.c.l.b16 %v1027
    %v1160 = vunpack.c.h.b16 %v1027
    %v1161 = vunpack.c.l.b16 %v1028
    %v1162 = vpack.c.b16 %v1090, %v1087
    %v1163 = vpack.c.b16 %v1091, %v1088
    %v1164 = vpack.c.b16 %v1092, %v1089
    %v1165 = vpack.c.b16 %v1096, %v1093
    %v1166 = vpack.c.b16 %v1097, %v1094
    %v1167 = vpack.c.b16 %v1098, %v1095
    %v1168 = vpack.c.b16 %v1102, %v1099
    %v1169 = vpack.c.b16 %v1103, %v1100
    %v1170 = vpack.c.b16 %v1104, %v1101
    %v1171 = vpack.c.b16 %v1108, %v1105
    %v1172 = vpack.c.b16 %v1109, %v1106
    %v1173 = vpack.c.b16 %v1110, %v1107
    %v1174 = vpack.c.b16 %v1114, %v1111
    %v1175 = vpack.c.b16 %v1115, %v1112
    %v1176 = vpack.c.b16 %v1116, %v1113
    %v1177 = vpack.c.b16 %v1120, %v1117
    %v1178 = vpack.c.b16 %v1121, %v1118
    %v1179 = vpack.c.b16 %v1122, %v1119
    %v1180 = vpack.c.b16 %v1126, %v1123
    %v1181 = vpack.c.b16 %v1127, %v1124
    %v1182 = vpack.c.b16 %v1128, %v1125
    %v1183 = vpack.c.b16 %v1132, %v1129
    %v1184 = vpack.c.b16 %v1133, %v1130
    %v1185 = vpack.c.b16 %v1134, %v1131
    %v1186 = vpack.c.b16 %v1138, %v1135
    %v1187 = vpack.c.b16 %v1139, %v1136
    %v1188 = vpack.c.b16 %v1140, %v1137
    %v1189 = vpack.c.b16 %v1144, %v1141
    %v1190 = vpack.c.b16 %v1145, %v1142
    %v1191 = vpack.c.b16 %v1146, %v1143
    %v1192 = vpack.c.b16 %v1150, %v1147
    %v1193 = vpack.c.b16 %v1151, %v1148
    %v1194 = vpack.c.b16 %v1152, %v1149
    %v1195 = vpack.c.b16 %v1156, %v1153
    %v1196 = vpack.c.b16 %v1157, %v1154
    %v1197 = vpack.c.b16 %v1158, %v1155
    %v1198 = vpack.c.b16 %v1159, %v1159
    %v1199 = vpack.c.b16 %v1160, %v1160
    %v1200 = vpack.c.b16 %v1161, %v1161
    %v1238 = vsel %vm483, %v978, 0
    %v1241 = vsel %vm487, %v1198, 0
    %v1244 = vsel %vm487, %v1199, 0
    %v1247 = vsel %vm487, %v1200, 0
    %1249 = vmatpush.bf16.msra.mxu0 %v1183
    %1250 = vmatpush.bf16.msra.mxu0 %v1180
    %1251 = vmatpush.bf16.msra.mxu0 %v1177
    %1252 = vmatpush.bf16.msra.mxu0 %v1174
    %1253 = vmatpush.bf16.msra.mxu0 %v1171
    %1254 = vmatpush.bf16.msra.mxu0 %v1168
    %1255 = vmatpush.bf16.msra.mxu0 %v1165
    %1256 = vmatpush.bf16.msra.mxu0 %v1162
    %1257 = vmatmul.bf16.gmra.mxu0 %v977
    %v1258 = vpop.f32.mrf.mxu0
    %v1259 = vadd.f32 %v1031, %v1258
    %v1260 = vpop.f32.mrf.mxu0
    %1261 = vdwg.mxu0
    %1262 = vmatpush.bf16.msra.mxu0 0
    %1263 = vmatpush.bf16.msra.mxu0 0
    %1264 = vmatpush.bf16.msra.mxu0 0
    %1265 = vmatpush.bf16.msra.mxu0 %v1241
    %1266 = vmatpush.bf16.msra.mxu0 %v1195
    %1267 = vmatpush.bf16.msra.mxu0 %v1192
    %1268 = vmatpush.bf16.msra.mxu0 %v1189
    %1269 = vmatpush.bf16.msra.mxu0 %v1186
    %1270 = vmatmul.bf16.gmra.mxu0 %v1238
    %v1271 = vpop.f32.mrf.mxu0
    %v1272 = vadd.f32 %v1259, %v1271
    %v1273 = vpop.f32.mrf.mxu0
    %1274 = vdwg.mxu0
    %1275 = vmatpush.bf16.msra.mxu0 %v1184
    %1276 = vmatpush.bf16.msra.mxu0 %v1181
    %1277 = vmatpush.bf16.msra.mxu0 %v1178
    %1278 = vmatpush.bf16.msra.mxu0 %v1175
    %1279 = vmatpush.bf16.msra.mxu0 %v1172
    %1280 = vmatpush.bf16.msra.mxu0 %v1169
    %1281 = vmatpush.bf16.msra.mxu0 %v1166
    %1282 = vmatpush.bf16.msra.mxu0 %v1163
    %1283 = vmatmul.bf16.gmra.mxu0 %v977
    %v1284 = vpop.f32.mrf.mxu0
    %v1285 = vadd.f32 %v1032, %v1284
    %v1286 = vpop.f32.mrf.mxu0
    %1287 = vdwg.mxu0
    %1288 = vmatpush.bf16.msra.mxu0 0
    %1289 = vmatpush.bf16.msra.mxu0 0
    %1290 = vmatpush.bf16.msra.mxu0 0
    %1291 = vmatpush.bf16.msra.mxu0 %v1244
    %1292 = vmatpush.bf16.msra.mxu0 %v1196
    %1293 = vmatpush.bf16.msra.mxu0 %v1193
    %1294 = vmatpush.bf16.msra.mxu0 %v1190
    %1295 = vmatpush.bf16.msra.mxu0 %v1187
    %1296 = vmatmul.bf16.gmra.mxu0 %v1238
    %v1297 = vpop.f32.mrf.mxu0
    %v1298 = vadd.f32 %v1285, %v1297
    %v1299 = vpop.f32.mrf.mxu0
    %1300 = vdwg.mxu0
    %1301 = vmatpush.bf16.msra.mxu0 %v1185
    %1302 = vmatpush.bf16.msra.mxu0 %v1182
    %1303 = vmatpush.bf16.msra.mxu0 %v1179
    %1304 = vmatpush.bf16.msra.mxu0 %v1176
    %1305 = vmatpush.bf16.msra.mxu0 %v1173
    %1306 = vmatpush.bf16.msra.mxu0 %v1170
    %1307 = vmatpush.bf16.msra.mxu0 %v1167
    %1308 = vmatpush.bf16.msra.mxu0 %v1164
    %1309 = vmatmul.bf16.gmra.mxu0 %v977
    %v1310 = vpop.f32.mrf.mxu0
    %v1311 = vadd.f32 %v1033, %v1310
    %v1312 = vpop.f32.mrf.mxu0
    %1313 = vdwg.mxu0
    %1314 = vmatpush.bf16.msra.mxu0 0
    %1315 = vmatpush.bf16.msra.mxu0 0
    %1316 = vmatpush.bf16.msra.mxu0 0
    %1317 = vmatpush.bf16.msra.mxu0 %v1247
    %1318 = vmatpush.bf16.msra.mxu0 %v1197
    %1319 = vmatpush.bf16.msra.mxu0 %v1194
    %1320 = vmatpush.bf16.msra.mxu0 %v1191
    %1321 = vmatpush.bf16.msra.mxu0 %v1188
    %1322 = vmatmul.bf16.gmra.mxu0 %v1238
    %v1323 = vpop.f32.mrf.mxu0
    %v1324 = vadd.f32 %v1311, %v1323
    %v1325 = vpop.f32.mrf.mxu0
    %1326 = vdwg.mxu0
    %v1327 = vxor.u32 %v1272, 2147483648
    %v1328 = vxor.u32 %v1298, 2147483648
    %v1329 = vxor.u32 %v1324, 2147483648
    %v1330 = vmul.f32 %v1327, 1.442695
    %v1331 = vpow.pop %v1330
    %v1332 = vmul.f32 %v1328, 1.442695
    %v1333 = vpow.pop %v1332
    %v1334 = vmul.f32 %v1329, 1.442695
    %v1335 = vpow.pop %v1334
    %v1336 = vadd.f32 %v1331, 1.0
    %v1337 = vadd.f32 %v1333, 1.0
    %v1338 = vadd.f32 %v1335, 1.0
    %v1339 = vrcp.pop %v1336
    %v1340 = vmul.f32 %v1336, %v1339
    %v1341 = vsub.f32 1.0, %v1340
    %v1342 = vmul.f32 %v1339, %v1341
    %v1343 = vadd.f32 %v1339, %v1342
    %vm1344 = vweird.f32 %v1336
    %vm1345 = vweird.f32 %v1339
    %vm1346 = vmor %vm1344, %vm1345
    %v1347 = vsel %vm1346, %v1339, %v1343
    %v1348 = vand.u32 2147483647, %v1336
    %vm1349 = vcmp.eq.f32.partialorder %v1348, 8.507059e+37
    %v1350 = vand.u32 %v1336, 2147483648
    %v1351 = vor.u32 1.1754944e-38, %v1350
    %v1352 = vsel %vm1349, %v1351, %v1347
    %v1353 = vmul.f32 1.0, %v1352
    %v1354 = vrcp.pop %v1337
    %v1355 = vmul.f32 %v1337, %v1354
    %v1356 = vsub.f32 1.0, %v1355
    %v1357 = vmul.f32 %v1354, %v1356
    %v1358 = vadd.f32 %v1354, %v1357
    %vm1359 = vweird.f32 %v1337
    %vm1360 = vweird.f32 %v1354
    %vm1361 = vmor %vm1359, %vm1360
    %v1362 = vsel %vm1361, %v1354, %v1358
    %v1363 = vand.u32 2147483647, %v1337
    %vm1364 = vcmp.eq.f32.partialorder %v1363, 8.507059e+37
    %v1365 = vand.u32 %v1337, 2147483648
    %v1366 = vor.u32 1.1754944e-38, %v1365
    %v1367 = vsel %vm1364, %v1366, %v1362
    %v1368 = vmul.f32 1.0, %v1367
    %v1369 = vrcp.pop %v1338
    %v1370 = vmul.f32 %v1338, %v1369
    %v1371 = vsub.f32 1.0, %v1370
    %v1372 = vmul.f32 %v1369, %v1371
    %v1373 = vadd.f32 %v1369, %v1372
    %vm1374 = vweird.f32 %v1338
    %vm1375 = vweird.f32 %v1369
    %vm1376 = vmor %vm1374, %vm1375
    %v1377 = vsel %vm1376, %v1369, %v1373
    %v1378 = vand.u32 2147483647, %v1338
    %vm1379 = vcmp.eq.f32.partialorder %v1378, 8.507059e+37
    %v1380 = vand.u32 %v1338, 2147483648
    %v1381 = vor.u32 1.1754944e-38, %v1380
    %v1382 = vsel %vm1379, %v1381, %v1377
    %v1383 = vmul.f32 1.0, %v1382
    %1384 = vst [vmem:[#allocation2] sm:$0xff] %v1353
    %1385 = vst [vmem:[#allocation2 + $0x8] sm:$0xff] %v1368
    %1386 = vst.msk [vmem:[#allocation2 + $0x10] sm:$0xff] %vm286, %v1383
    %vm1387 = vcmask 195584
    %1388 = vst.msk [vmem:[%s14] sm:$0xff] %vm1387, %v702
    // Predicated region
    $region54: #{vae1_forward.1} parent=1 // pred_check
      _
    $region55: #{vae1_forward.1} parent=1 // pred_check_branch
      %1390 = sbr.rel (0) target = $region57
    $region56: #{vae1_forward.1} parent=1 // pred_region
      %1392 = vsyncadd [#allocation3], 0
      %s1394 = sshll.u32 [#allocation2], 4
      %s1395 = int_to_ptr.vmem [resolvable:$true] %s1394
      %s1396 = sshll.u32 %s13, 4
      %s1397 = int_to_ptr.hbm [resolvable:$true] %s1396
      %1399 = dma.vmem_to_hbm [thread:$0]  %s1395, 384, %s1397, [#allocation3]
    $region57: #{vae1_forward.1} parent=1 // pred_fallthru
      _
    // Predicated region
    $region58: #{vae1_forward.1} parent=1 // pred_check
      _
    $region59: #{vae1_forward.1} parent=1 // pred_check_branch
      %1401 = sbr.rel (0) target = $region61
    $region60: #{vae1_forward.1} parent=1 // pred_region
      _
    $region61: #{vae1_forward.1} parent=1 // pred_fallthru
      _
    // Predicated region
    $region62: #{vae1_forward.1} parent=1 // pred_check
      _
    $region63: #{vae1_forward.1} parent=1 // pred_check_branch
      %1403 = sbr.rel (0) target = $region65
    $region64: #{vae1_forward.1} parent=1 // pred_region
      %1405 = dma.done [#allocation3], 384
    $region65: #{vae1_forward.1} parent=1 // pred_fallthru
      _
    // Predicated region
    $region66: #{vae1_forward.1} parent=1 // pred_check
      _
    $region67: #{vae1_forward.1} parent=1 // pred_check_branch
      %1407 = sbr.rel (0) target = $region69
    $region68: #{vae1_forward.1} parent=1 // pred_region
      _
    $region69: #{vae1_forward.1} parent=1 // pred_fallthru
      _
    %1408 = vsyncpa [#allocation3], 1

</llo_original>
